<compile_context>
chip_gen: v7x
topology: tpu7x:2x2x1
jax: 0.10.0
libtpu: 0.0.40
codegen_flags: <defaults>
</compile_context>

<pallas_src>
import functools

import numpy as np

import jax
import jax.numpy as jnp
from jax.experimental import pallas as pl
from jax.experimental.pallas import tpu as pltpu  # noqa: F401  (TPU backend)

# ----------------------------- model sizes ---------------------------------
B = 2            # batch
NQ = 4           # num question hyperedges
NK = 6           # num kg hyperedges
QNODE = 3        # NUM_MAX_QNODE
KNODE = 4        # NUM_MAX_KNODE_{n_hop}H
EMB = 16         # NUM_WORD_EMB
H = 32           # NUM_HIDDEN
NOUT = 16        # NUM_OUT (== glove answer-candidate dim)
NANS = 10        # number of answer candidates (len_avocab)
N_TOKEN = 50     # vocab size for ClassEmbedding
N_LAYERS = 2     # args.num_layers (curvatures has 4 entries -> up to 3 layers)

NQ_ROWS = B * NQ                 # 8   (q rows come first in the stack)
NK_ROWS = B * NK                 # 12
NTOT = NQ_ROWS + NK_ROWS         # 20
KIN = EMB * QNODE + EMB * KNODE  # 112 (merged linear input width)

MIN_NORM = 1e-15
EPS_F32 = 4e-3   # Hyperboloid eps[torch.float32]

# --------------------- packed parameter buffer layout -----------------------
PACK_W = 32      # == H; every segment has <= 32 columns


def _round8(n):
    return ((n + 7) // 8) * 8


_SEG_ROWS = (
    ("lin_w", KIN),      # [q2h_w ; k2h_w]            (112, 32)
    ("lin_b", NTOT),     # row-broadcast biases       (20, 32)
    ("p1_w", 2 * H),     # proj1 weight               (64, 32)
    ("p1_b", 1),         # proj1 bias                 (1, 32)
    ("w2g", H),          # proj2_w @ glove^T          (32, 10)
    ("b2g", 1),          # proj2_b @ glove^T          (1, 10)
    ("mean", 2 * B),     # hyperedge mean matrix      (4, 20)
    ("attb", NTOT),      # additive attention bias    (20, 20)
)
_SEG_OFF = {}
_off = 0
for _name, _rows in _SEG_ROWS:
    _SEG_OFF[_name] = _off
    _off += _round8(_rows)
PACK_ROWS = _off   # 280

OFF_LINW = _SEG_OFF["lin_w"]
OFF_LINB = _SEG_OFF["lin_b"]
OFF_P1W = _SEG_OFF["p1_w"]
OFF_P1B = _SEG_OFF["p1_b"]
OFF_W2G = _SEG_OFF["w2g"]
OFF_B2G = _SEG_OFF["b2g"]
OFF_MEAN = _SEG_OFF["mean"]
OFF_ATTB = _SEG_OFF["attb"]


# ----------------------- hyperboloid math (in-kernel) ----------------------
def _first_col_mask(shape):
    col = jax.lax.broadcasted_iota(jnp.int32, shape, dimension=1)
    return col == 0


def _proj_tan0(u):
    # zero the time-like (first) coordinate
    return jnp.where(_first_col_mask(u.shape), 0.0, u)


def _expmap0(u, c):
    # u: (N, D) tangent vectors at the origin (u[:, 0] assumed 0)
    K = 1.0 / c
    sqrtK = K ** 0.5
    first = _first_col_mask(u.shape)
    tail = jnp.where(first, 0.0, u)
    x_norm = jnp.maximum(jnp.sqrt(jnp.sum(tail * tail, axis=1, keepdims=True)), MIN_NORM)
    inv_norm = 1.0 / x_norm
    theta = x_norm * (1.0 / sqrtK)
    e_pos = jnp.exp(theta)
    e_neg = jnp.exp(-theta)            # exact: avoids sinh cancellation (review)
    cosh_t = 0.5 * (e_pos + e_neg)
    sinh_t = 0.5 * (e_pos - e_neg)
    res_first = sqrtK * cosh_t
    res_tail = (sqrtK * sinh_t) * inv_norm * tail
    return jnp.where(first, res_first, res_tail)


def _proj(x, c):
    K = 1.0 / c
    first = _first_col_mask(x.shape)
    y = jnp.where(first, 0.0, x)
    y_sqnorm = jnp.sum(y * y, axis=1, keepdims=True)
    x0 = jnp.sqrt(jnp.maximum(K + y_sqnorm, EPS_F32))
    return jnp.where(first, x0, x)


def _logmap0(x, c):
    K = 1.0 / c
    sqrtK = K ** 0.5
    first = _first_col_mask(x.shape)
    y = jnp.where(first, 0.0, x)
    y_norm = jnp.maximum(jnp.sqrt(jnp.sum(y * y, axis=1, keepdims=True)), MIN_NORM)
    theta = jnp.maximum(x[:, 0:1] * (1.0 / sqrtK), 1.0 + EPS_F32)
    arcosh = jnp.log(theta + jnp.sqrt(theta * theta - 1.0))
    return jnp.where(first, 0.0, ((sqrtK * arcosh) / y_norm) * y)


# ------------------------------ fused kernel --------------------------------
def fused_forward_kernel(x_ref, p_ref, o_ref, *, c_emb, c_att, c_last, n_layers):
    # ---- merged q2h/k2h linear (block-layout input, stacked weight) ---------
    x = x_ref[...]                                                # (20, 112)
    w_lin = p_ref[OFF_LINW:OFF_LINW + KIN, :]                      # (112, 32)
    b_lin = p_ref[OFF_LINB:OFF_LINB + NTOT, :]                     # (20, 32)
    h0 = jnp.dot(x, w_lin, preferred_element_type=jnp.float32) + b_lin

    # ---- hyperbolic embedding, stacked q|k ----------------------------------
    hyp = _proj(_expmap0(_proj_tan0(h0), c_emb), c_emb)            # (20, 32)
    # (input dropout is identity in eval mode; kg_euc in the reference is dead code)

    # ---- HyperbolicAttentionNetwork stack ------------------------------------
    # TODO(synk): HyperbolicAttentionNetwork source was not provided; this is a
    # tangent-space stand-in (logmap0 -> masked scaled-dot cross attention ->
    # expmap0).  Activations stay in tangent space between the unrolled layers.
    tan = _logmap0(hyp, c_att)                                     # (20, 32)

    att_bias = p_ref[OFF_ATTB:OFF_ATTB + NTOT, 0:NTOT]             # (20, 20)
    scale = 1.0 / float(H) ** 0.5

    for _ in range(n_layers):                 # unrolled (n_layers is static)
        # one score matmul serves both directions; the additive bias keeps
        # q rows attending only to same-batch k columns and vice versa.
        s = jax.lax.dot_general(tan, tan, (((1,), (1,)), ((), ())),
                                preferred_element_type=jnp.float32) * scale + att_bias
        m = jnp.max(s, axis=-1, keepdims=True)
        p = jnp.exp(s - m)
        p = p * pl.reciprocal(jnp.sum(p, axis=-1, keepdims=True), approx=True)
        att = jnp.dot(p, tan, preferred_element_type=jnp.float32)  # (20, 32)
        tan = _proj_tan0(att)

    # back onto the hyperboloid after the last layer (once, on the stack)
    out_hyp = _proj(_expmap0(tan, c_att), c_att)                   # (20, 32)

    # ---- mean over hyperedge axis (segment mean as one tiny matmul) ----------
    mean_mat = p_ref[OFF_MEAN:OFF_MEAN + 2 * B, 0:NTOT]            # (4, 20)
    means = jnp.dot(mean_mat, out_hyp, preferred_element_type=jnp.float32)  # (4, 32)
    # rows 0..B-1 = kg means, rows B..2B-1 = ques means
    last_kq = jnp.concatenate([means[0:B, :], means[B:2 * B, :]], axis=1)   # (2, 64)

    # ---- proj_tan0(logmap0(.)) back to Euclidean space ------------------------
    euclid = _logmap0(last_kq, c_last)   # logmap0 already zeroes the first column

    # ---- proj1 -> relu -> (dropout: identity) -> folded(proj2 @ glove^T) ------
    p1_w = p_ref[OFF_P1W:OFF_P1W + 2 * H, :]                       # (64, 32)
    p1_b = p_ref[OFF_P1B:OFF_P1B + 1, :]                           # (1, 32)
    h1 = jnp.dot(euclid, p1_w, preferred_element_type=jnp.float32) + p1_b
    h1 = jnp.maximum(h1, 0.0)

    w2g = p_ref[OFF_W2G:OFF_W2G + H, 0:NANS]                       # (32, 10)
    b2g = p_ref[OFF_B2G:OFF_B2G + 1, 0:NANS]                       # (1, 10)
    sim = jnp.dot(h1, w2g, preferred_element_type=jnp.float32) + b2g

    # AnswerSelector: log_softmax(dim=1)  (kept exact)
    mm = jnp.max(sim, axis=1, keepdims=True)
    z = sim - mm
    lse = jnp.log(jnp.sum(jnp.exp(z), axis=1, keepdims=True))
    o_ref[...] = z - lse


# ------------------------------ parameters -----------------------------------
def _static_mean_matrix():
    """(2B, NTOT) averaging matrix over the stacked [q rows ; k rows] order."""
    mean = np.zeros((2 * B, NTOT), np.float32)
    for b in range(B):
        mean[b, NQ_ROWS + b * NK: NQ_ROWS + (b + 1) * NK] = 1.0 / NK   # kg mean
        mean[B + b, b * NQ: (b + 1) * NQ] = 1.0 / NQ                   # ques mean
    return mean


def _static_attention_bias():
    """(NTOT, NTOT) additive bias: 0 where same batch AND opposite q/k type."""
    is_q = np.array([1] * NQ_ROWS + [0] * NK_ROWS)
    batch_of = np.array([i // NQ for i in range(NQ_ROWS)]
                        + [i // NK for i in range(NK_ROWS)])
    allowed = (batch_of[:, None] == batch_of[None, :]) & (is_q[:, None] != is_q[None, :])
    return np.where(allowed, 0.0, -1e30).astype(np.float32)


def init_params(key):
    ks = jax.random.split(key, 10)
    f32 = jnp.float32
    emb = (0.1 * jax.random.normal(ks[0], (N_TOKEN, EMB))).astype(f32)
    q2h_w = (jax.random.normal(ks[1], (EMB * QNODE, H)) / (EMB * QNODE) ** 0.5).astype(f32)
    q2h_b = (0.01 * jax.random.normal(ks[2], (1, H))).astype(f32)
    k2h_w = (jax.random.normal(ks[3], (EMB * KNODE, H)) / (EMB * KNODE) ** 0.5).astype(f32)
    k2h_b = (0.01 * jax.random.normal(ks[4], (1, H))).astype(f32)
    proj1_w = (jax.random.normal(ks[5], (2 * H, H)) / (2 * H) ** 0.5).astype(f32)
    proj1_b = (0.01 * jax.random.normal(ks[6], (1, H))).astype(f32)
    proj2_w = (jax.random.normal(ks[7], (H, NOUT)) / H ** 0.5).astype(f32)
    proj2_b = (0.01 * jax.random.normal(ks[8], (1, NOUT))).astype(f32)
    glove_cands = (0.3 * jax.random.normal(ks[9], (NANS, NOUT))).astype(f32)

    # ---- init-time folds (out of the per-call path, per review) -------------
    w_lin = jnp.concatenate([q2h_w, k2h_w], axis=0)                 # (112, 32)
    b_lin = jnp.concatenate([jnp.broadcast_to(q2h_b, (NQ_ROWS, H)),
                             jnp.broadcast_to(k2h_b, (NK_ROWS, H))], axis=0)  # (20, 32)
    w2g = jnp.dot(proj2_w, glove_cands.T)                           # (32, 10)
    b2g = jnp.dot(proj2_b, glove_cands.T)                           # (1, 10)
    mean_mat = jnp.asarray(_static_mean_matrix())                   # (4, 20)
    att_bias = jnp.asarray(_static_attention_bias())                # (20, 20)

    # ---- pack everything into one f32 buffer (single input DMA) -------------
    packed = jnp.zeros((PACK_ROWS, PACK_W), f32)
    for name, mat in (("lin_w", w_lin), ("lin_b", b_lin),
                      ("p1_w", proj1_w), ("p1_b", proj1_b),
                      ("w2g", w2g), ("b2g", b2g),
                      ("mean", mean_mat), ("attb", att_bias)):
        r, c = mat.shape
        off = _SEG_OFF[name]
        packed = packed.at[off:off + r, 0:c].set(mat)

    return {
        "emb": emb,
        "packed": packed,
        "curvatures": jnp.array([1.0, 1.0, 1.0, 1.0], dtype=f32),
    }


# -------------------------------- forward ------------------------------------
def hypergraph_transformer_forward(params, he_ques_id, he_kg_id, labels):
    num_batch, num_he_ques, _ = he_ques_id.shape
    _, num_he_kg, _ = he_kg_id.shape

    # i2e (ClassEmbedding): table lookup + nan cleanup (tiny XLA glue feeding the
    # fused kernel; the gather has no cheaper in-kernel form at these sizes).
    he_ques = params["emb"][he_ques_id].reshape(num_batch * num_he_ques, -1)  # (8, 48)
    he_kg = params["emb"][he_kg_id].reshape(num_batch * num_he_kg, -1)        # (12, 64)
    he_ques = jnp.where(jnp.isnan(he_ques), 0.0, he_ques)
    he_kg = jnp.where(jnp.isnan(he_kg), 0.0, he_kg)

    # Block layout for the merged q2h/k2h linear: q rows use cols [0, 48),
    # k rows use cols [48, 112); the packed weight is [q2h_w ; k2h_w].
    x = jnp.concatenate(
        [jnp.pad(he_ques, ((0, 0), (0, EMB * KNODE))),
         jnp.pad(he_kg, ((0, 0), (EMB * QNODE, 0)))], axis=0)                 # (20, 112)

    # Curvatures are initialized to 1.0 in the reference; baked in as statics.
    kernel = functools.partial(fused_forward_kernel,
                               c_emb=1.0, c_att=1.0, c_last=1.0,
                               n_layers=N_LAYERS)

    pred = pl.pallas_call(
        kernel,
        out_shape=jax.ShapeDtypeStruct((num_batch, NANS), jnp.float32),
        cost_estimate=pl.CostEstimate(flops=400_000,
                                      transcendentals=1_500,
                                      bytes_accessed=48_000),
    )(x, params["packed"])

    # F.nll_loss is computed in the reference forward but not returned.
    _loss = -jnp.mean(pred[jnp.arange(num_batch), labels])
    del _loss

    return pred, params["curvatures"]


# --------------------------------- main ---------------------------------------
if __name__ == "__main__":
    key = jax.random.PRNGKey(0)
    k_p, k_q, k_k, k_l = jax.random.split(key, 4)

    params = init_params(k_p)
    he_ques_id = jax.random.randint(k_q, (B, NQ, QNODE), 0, N_TOKEN, dtype=jnp.int32)
    he_kg_id = jax.random.randint(k_k, (B, NK, KNODE), 0, N_TOKEN, dtype=jnp.int32)
    labels = jax.random.randint(k_l, (B,), 0, NANS, dtype=jnp.int32)

    pred, curvatures = jax.jit(hypergraph_transformer_forward)(
        params, he_ques_id, he_kg_id, labels)
    jax.block_until_ready((pred, curvatures))

    assert pred.shape == (B, NANS)
    assert bool(jnp.all(jnp.isfinite(pred)))
    # log_softmax rows must (log-)sum to ~0
    assert bool(jnp.all(jnp.abs(jnp.sum(jnp.exp(pred), axis=1) - 1.0) < 1e-4))
    print("KERNEL_OK")
</pallas_src>

<mosaic_0001>
module attributes {stable_mosaic.version = 11 : i64} {
  func.func @fused_forward_kernel(%arg0: memref<20x112xf32, #tpu.memory_space<vmem>>, %arg1: memref<280x32xf32, #tpu.memory_space<vmem>>, %arg2: memref<2x10xf32, #tpu.memory_space<vmem>>) attributes {dimension_semantics = [], scalar_prefetch = 0 : i64, scratch_operands = 0 : i64, tpu.core_type = #tpu.core_type<tc>} {
    %c0 = arith.constant 0 : index
    %c0_0 = arith.constant 0 : index
    %0 = vector.load %arg0[%c0, %c0_0] : memref<20x112xf32, #tpu.memory_space<vmem>>, vector<20x112xf32>
    %c0_1 = arith.constant 0 : index
    %c0_2 = arith.constant 0 : index
    %1 = vector.load %arg1[%c0_1, %c0_2] : memref<280x32xf32, #tpu.memory_space<vmem>>, vector<112x32xf32>
    %c112 = arith.constant 112 : index
    %c0_3 = arith.constant 0 : index
    %2 = vector.load %arg1[%c112, %c0_3] : memref<280x32xf32, #tpu.memory_space<vmem>>, vector<20x32xf32>
    %cst = arith.constant dense<0.000000e+00> : vector<20x32xf32>
    %3 = tpu.matmul %0, %1, %cst {dimension_numbers = #tpu.dot_dimension_numbers<[1], [0], [0], [1], [0, 0, 1, 1], [], []>} : vector<20x112xf32>, vector<112x32xf32>, vector<20x32xf32> -> vector<20x32xf32>
    %4 = arith.addf %3, %2 : vector<20x32xf32>
    %5 = tpu.iota {dimensions = array<i32: 1>} : vector<20x32xi32>
    %c0_i32 = arith.constant 0 : i32
    %6 = vector.broadcast %c0_i32 : i32 to vector<20x32xi32>
    %7 = arith.cmpi eq, %5, %6 : vector<20x32xi32>
    %cst_4 = arith.constant 0.000000e+00 : f32
    %8 = vector.broadcast %cst_4 : f32 to vector<20x32xf32>
    %9 = arith.select %7, %8, %4 : vector<20x32xi1>, vector<20x32xf32>
    %10 = tpu.iota {dimensions = array<i32: 1>} : vector<20x32xi32>
    %c0_i32_5 = arith.constant 0 : i32
    %11 = vector.broadcast %c0_i32_5 : i32 to vector<20x32xi32>
    %12 = arith.cmpi eq, %10, %11 : vector<20x32xi32>
    %cst_6 = arith.constant 0.000000e+00 : f32
    %13 = vector.broadcast %cst_6 : f32 to vector<20x32xf32>
    %14 = arith.select %12, %13, %9 : vector<20x32xi1>, vector<20x32xf32>
    %15 = arith.mulf %14, %14 : vector<20x32xf32>
    %cst_7 = arith.constant dense<0.000000e+00> : vector<20xf32>
    %16 = vector.multi_reduction <add>, %15, %cst_7 [1] : vector<20x32xf32> to vector<20xf32>
    %17 = vector.shape_cast %16 : vector<20xf32> to vector<20x1xf32>
    %18 = math.sqrt %17 : vector<20x1xf32>
    %cst_8 = arith.constant 1.000000e-15 : f32
    %19 = vector.broadcast %cst_8 : f32 to vector<20x1xf32>
    %20 = arith.maximumf %18, %19 : vector<20x1xf32>
    %cst_9 = arith.constant 1.000000e+00 : f32
    %21 = vector.broadcast %cst_9 : f32 to vector<20x1xf32>
    %22 = arith.divf %21, %20 : vector<20x1xf32>
    %cst_10 = arith.constant 1.000000e+00 : f32
    %23 = vector.broadcast %cst_10 : f32 to vector<20x1xf32>
    %24 = arith.mulf %20, %23 : vector<20x1xf32>
    %25 = math.exp %24 : vector<20x1xf32>
    %cst_11 = arith.constant 0.000000e+00 : f32
    %26 = vector.broadcast %cst_11 : f32 to vector<20x1xf32>
    %27 = arith.subf %26, %24 : vector<20x1xf32>
    %28 = math.exp %27 : vector<20x1xf32>
    %29 = arith.addf %25, %28 : vector<20x1xf32>
    %cst_12 = arith.constant 5.000000e-01 : f32
    %30 = vector.broadcast %cst_12 : f32 to vector<20x1xf32>
    %31 = arith.mulf %30, %29 : vector<20x1xf32>
    %32 = arith.subf %25, %28 : vector<20x1xf32>
    %cst_13 = arith.constant 5.000000e-01 : f32
    %33 = vector.broadcast %cst_13 : f32 to vector<20x1xf32>
    %34 = arith.mulf %33, %32 : vector<20x1xf32>
    %cst_14 = arith.constant 1.000000e+00 : f32
    %35 = vector.broadcast %cst_14 : f32 to vector<20x1xf32>
    %36 = arith.mulf %35, %31 : vector<20x1xf32>
    %cst_15 = arith.constant 1.000000e+00 : f32
    %37 = vector.broadcast %cst_15 : f32 to vector<20x1xf32>
    %38 = arith.mulf %37, %34 : vector<20x1xf32>
    %39 = arith.mulf %38, %22 : vector<20x1xf32>
    %40 = vector.broadcast %39 : vector<20x1xf32> to vector<20x32xf32>
    %41 = arith.mulf %40, %14 : vector<20x32xf32>
    %42 = vector.shape_cast %36 : vector<20x1xf32> to vector<20x1xf32>
    %43 = vector.broadcast %42 : vector<20x1xf32> to vector<20x32xf32>
    %44 = arith.select %12, %43, %41 : vector<20x32xi1>, vector<20x32xf32>
    %45 = tpu.iota {dimensions = array<i32: 1>} : vector<20x32xi32>
    %c0_i32_16 = arith.constant 0 : i32
    %46 = vector.broadcast %c0_i32_16 : i32 to vector<20x32xi32>
    %47 = arith.cmpi eq, %45, %46 : vector<20x32xi32>
    %cst_17 = arith.constant 0.000000e+00 : f32
    %48 = vector.broadcast %cst_17 : f32 to vector<20x32xf32>
    %49 = arith.select %47, %48, %44 : vector<20x32xi1>, vector<20x32xf32>
    %50 = arith.mulf %49, %49 : vector<20x32xf32>
    %cst_18 = arith.constant dense<0.000000e+00> : vector<20xf32>
    %51 = vector.multi_reduction <add>, %50, %cst_18 [1] : vector<20x32xf32> to vector<20xf32>
    %52 = vector.shape_cast %51 : vector<20xf32> to vector<20x1xf32>
    %cst_19 = arith.constant 1.000000e+00 : f32
    %53 = vector.broadcast %cst_19 : f32 to vector<20x1xf32>
    %54 = arith.addf %53, %52 : vector<20x1xf32>
    %cst_20 = arith.constant 4.000000e-03 : f32
    %55 = vector.broadcast %cst_20 : f32 to vector<20x1xf32>
    %56 = arith.maximumf %54, %55 : vector<20x1xf32>
    %57 = math.sqrt %56 : vector<20x1xf32>
    %58 = vector.shape_cast %57 : vector<20x1xf32> to vector<20x1xf32>
    %59 = vector.broadcast %58 : vector<20x1xf32> to vector<20x32xf32>
    %60 = arith.select %47, %59, %44 : vector<20x32xi1>, vector<20x32xf32>
    %61 = tpu.iota {dimensions = array<i32: 1>} : vector<20x32xi32>
    %c0_i32_21 = arith.constant 0 : i32
    %62 = vector.broadcast %c0_i32_21 : i32 to vector<20x32xi32>
    %63 = arith.cmpi eq, %61, %62 : vector<20x32xi32>
    %cst_22 = arith.constant 0.000000e+00 : f32
    %64 = vector.broadcast %cst_22 : f32 to vector<20x32xf32>
    %65 = arith.select %63, %64, %60 : vector<20x32xi1>, vector<20x32xf32>
    %66 = arith.mulf %65, %65 : vector<20x32xf32>
    %cst_23 = arith.constant dense<0.000000e+00> : vector<20xf32>
    %67 = vector.multi_reduction <add>, %66, %cst_23 [1] : vector<20x32xf32> to vector<20xf32>
    %68 = vector.shape_cast %67 : vector<20xf32> to vector<20x1xf32>
    %69 = math.sqrt %68 : vector<20x1xf32>
    %cst_24 = arith.constant 1.000000e-15 : f32
    %70 = vector.broadcast %cst_24 : f32 to vector<20x1xf32>
    %71 = arith.maximumf %69, %70 : vector<20x1xf32>
    %72 = vector.extract_strided_slice %60 {offsets = [0, 0], sizes = [20, 1], strides = [1, 1]} : vector<20x32xf32> to vector<20x1xf32>
    %cst_25 = arith.constant 1.000000e+00 : f32
    %73 = vector.broadcast %cst_25 : f32 to vector<20x1xf32>
    %74 = arith.mulf %72, %73 : vector<20x1xf32>
    %cst_26 = arith.constant 1.004000e+00 : f32
    %75 = vector.broadcast %cst_26 : f32 to vector<20x1xf32>
    %76 = arith.maximumf %74, %75 : vector<20x1xf32>
    %77 = arith.mulf %76, %76 : vector<20x1xf32>
    %cst_27 = arith.constant 1.000000e+00 : f32
    %78 = vector.broadcast %cst_27 : f32 to vector<20x1xf32>
    %79 = arith.subf %77, %78 : vector<20x1xf32>
    %80 = math.sqrt %79 : vector<20x1xf32>
    %81 = arith.addf %76, %80 : vector<20x1xf32>
    %82 = math.log %81 : vector<20x1xf32>
    %cst_28 = arith.constant 1.000000e+00 : f32
    %83 = vector.broadcast %cst_28 : f32 to vector<20x1xf32>
    %84 = arith.mulf %83, %82 : vector<20x1xf32>
    %85 = arith.divf %84, %71 : vector<20x1xf32>
    %86 = vector.broadcast %85 : vector<20x1xf32> to vector<20x32xf32>
    %87 = arith.mulf %86, %65 : vector<20x32xf32>
    %cst_29 = arith.constant 0.000000e+00 : f32
    %88 = vector.broadcast %cst_29 : f32 to vector<20x32xf32>
    %89 = arith.select %63, %88, %87 : vector<20x32xi1>, vector<20x32xf32>
    %c256 = arith.constant 256 : index
    %c0_30 = arith.constant 0 : index
    %90 = vector.load %arg1[%c256, %c0_30] : memref<280x32xf32, #tpu.memory_space<vmem>>, vector<20x20xf32>
    %cst_31 = arith.constant dense<0.000000e+00> : vector<20x20xf32>
    %91 = tpu.matmul %89, %89, %cst_31 {dimension_numbers = #tpu.dot_dimension_numbers<[1], [1], [0], [0], [0, 0, 1, 0], [], []>} : vector<20x32xf32>, vector<20x32xf32>, vector<20x20xf32> -> vector<20x20xf32>
    %cst_32 = arith.constant 0.176776692 : f32
    %92 = vector.broadcast %cst_32 : f32 to vector<20x20xf32>
    %93 = arith.mulf %91, %92 : vector<20x20xf32>
    %94 = arith.addf %93, %90 : vector<20x20xf32>
    %cst_33 = arith.constant dense<0xFF800000> : vector<20xf32>
    %95 = vector.multi_reduction <maximumf>, %94, %cst_33 [1] : vector<20x20xf32> to vector<20xf32>
    %96 = vector.shape_cast %95 : vector<20xf32> to vector<20x1xf32>
    %97 = vector.broadcast %96 : vector<20x1xf32> to vector<20x20xf32>
    %98 = arith.subf %94, %97 : vector<20x20xf32>
    %99 = math.exp %98 : vector<20x20xf32>
    %cst_34 = arith.constant dense<0.000000e+00> : vector<20xf32>
    %100 = vector.multi_reduction <add>, %99, %cst_34 [1] : vector<20x20xf32> to vector<20xf32>
    %101 = vector.shape_cast %100 : vector<20xf32> to vector<20x1xf32>
    %102 = tpu.reciprocal %101 {approx = true} : vector<20x1xf32> -> vector<20x1xf32>
    %103 = vector.broadcast %102 : vector<20x1xf32> to vector<20x20xf32>
    %104 = arith.mulf %99, %103 : vector<20x20xf32>
    %cst_35 = arith.constant dense<0.000000e+00> : vector<20x32xf32>
    %105 = tpu.matmul %104, %89, %cst_35 {dimension_numbers = #tpu.dot_dimension_numbers<[1], [0], [0], [1], [0, 0, 1, 1], [], []>} : vector<20x20xf32>, vector<20x32xf32>, vector<20x32xf32> -> vector<20x32xf32>
    %106 = tpu.iota {dimensions = array<i32: 1>} : vector<20x32xi32>
    %c0_i32_36 = arith.constant 0 : i32
    %107 = vector.broadcast %c0_i32_36 : i32 to vector<20x32xi32>
    %108 = arith.cmpi eq, %106, %107 : vector<20x32xi32>
    %cst_37 = arith.constant 0.000000e+00 : f32
    %109 = vector.broadcast %cst_37 : f32 to vector<20x32xf32>
    %110 = arith.select %108, %109, %105 : vector<20x32xi1>, vector<20x32xf32>
    %cst_38 = arith.constant dense<0.000000e+00> : vector<20x20xf32>
    %111 = tpu.matmul %110, %110, %cst_38 {dimension_numbers = #tpu.dot_dimension_numbers<[1], [1], [0], [0], [0, 0, 1, 0], [], []>} : vector<20x32xf32>, vector<20x32xf32>, vector<20x20xf32> -> vector<20x20xf32>
    %cst_39 = arith.constant 0.176776692 : f32
    %112 = vector.broadcast %cst_39 : f32 to vector<20x20xf32>
    %113 = arith.mulf %111, %112 : vector<20x20xf32>
    %114 = arith.addf %113, %90 : vector<20x20xf32>
    %cst_40 = arith.constant dense<0xFF800000> : vector<20xf32>
    %115 = vector.multi_reduction <maximumf>, %114, %cst_40 [1] : vector<20x20xf32> to vector<20xf32>
    %116 = vector.shape_cast %115 : vector<20xf32> to vector<20x1xf32>
    %117 = vector.broadcast %116 : vector<20x1xf32> to vector<20x20xf32>
    %118 = arith.subf %114, %117 : vector<20x20xf32>
    %119 = math.exp %118 : vector<20x20xf32>
    %cst_41 = arith.constant dense<0.000000e+00> : vector<20xf32>
    %120 = vector.multi_reduction <add>, %119, %cst_41 [1] : vector<20x20xf32> to vector<20xf32>
    %121 = vector.shape_cast %120 : vector<20xf32> to vector<20x1xf32>
    %122 = tpu.reciprocal %121 {approx = true} : vector<20x1xf32> -> vector<20x1xf32>
    %123 = vector.broadcast %122 : vector<20x1xf32> to vector<20x20xf32>
    %124 = arith.mulf %119, %123 : vector<20x20xf32>
    %cst_42 = arith.constant dense<0.000000e+00> : vector<20x32xf32>
    %125 = tpu.matmul %124, %110, %cst_42 {dimension_numbers = #tpu.dot_dimension_numbers<[1], [0], [0], [1], [0, 0, 1, 1], [], []>} : vector<20x20xf32>, vector<20x32xf32>, vector<20x32xf32> -> vector<20x32xf32>
    %126 = tpu.iota {dimensions = array<i32: 1>} : vector<20x32xi32>
    %c0_i32_43 = arith.constant 0 : i32
    %127 = vector.broadcast %c0_i32_43 : i32 to vector<20x32xi32>
    %128 = arith.cmpi eq, %126, %127 : vector<20x32xi32>
    %cst_44 = arith.constant 0.000000e+00 : f32
    %129 = vector.broadcast %cst_44 : f32 to vector<20x32xf32>
    %130 = arith.select %128, %129, %125 : vector<20x32xi1>, vector<20x32xf32>
    %131 = tpu.iota {dimensions = array<i32: 1>} : vector<20x32xi32>
    %c0_i32_45 = arith.constant 0 : i32
    %132 = vector.broadcast %c0_i32_45 : i32 to vector<20x32xi32>
    %133 = arith.cmpi eq, %131, %132 : vector<20x32xi32>
    %cst_46 = arith.constant 0.000000e+00 : f32
    %134 = vector.broadcast %cst_46 : f32 to vector<20x32xf32>
    %135 = arith.select %133, %134, %130 : vector<20x32xi1>, vector<20x32xf32>
    %136 = arith.mulf %135, %135 : vector<20x32xf32>
    %cst_47 = arith.constant dense<0.000000e+00> : vector<20xf32>
    %137 = vector.multi_reduction <add>, %136, %cst_47 [1] : vector<20x32xf32> to vector<20xf32>
    %138 = vector.shape_cast %137 : vector<20xf32> to vector<20x1xf32>
    %139 = math.sqrt %138 : vector<20x1xf32>
    %cst_48 = arith.constant 1.000000e-15 : f32
    %140 = vector.broadcast %cst_48 : f32 to vector<20x1xf32>
    %141 = arith.maximumf %139, %140 : vector<20x1xf32>
    %cst_49 = arith.constant 1.000000e+00 : f32
    %142 = vector.broadcast %cst_49 : f32 to vector<20x1xf32>
    %143 = arith.divf %142, %141 : vector<20x1xf32>
    %cst_50 = arith.constant 1.000000e+00 : f32
    %144 = vector.broadcast %cst_50 : f32 to vector<20x1xf32>
    %145 = arith.mulf %141, %144 : vector<20x1xf32>
    %146 = math.exp %145 : vector<20x1xf32>
    %cst_51 = arith.constant 0.000000e+00 : f32
    %147 = vector.broadcast %cst_51 : f32 to vector<20x1xf32>
    %148 = arith.subf %147, %145 : vector<20x1xf32>
    %149 = math.exp %148 : vector<20x1xf32>
    %150 = arith.addf %146, %149 : vector<20x1xf32>
    %cst_52 = arith.constant 5.000000e-01 : f32
    %151 = vector.broadcast %cst_52 : f32 to vector<20x1xf32>
    %152 = arith.mulf %151, %150 : vector<20x1xf32>
    %153 = arith.subf %146, %149 : vector<20x1xf32>
    %cst_53 = arith.constant 5.000000e-01 : f32
    %154 = vector.broadcast %cst_53 : f32 to vector<20x1xf32>
    %155 = arith.mulf %154, %153 : vector<20x1xf32>
    %cst_54 = arith.constant 1.000000e+00 : f32
    %156 = vector.broadcast %cst_54 : f32 to vector<20x1xf32>
    %157 = arith.mulf %156, %152 : vector<20x1xf32>
    %cst_55 = arith.constant 1.000000e+00 : f32
    %158 = vector.broadcast %cst_55 : f32 to vector<20x1xf32>
    %159 = arith.mulf %158, %155 : vector<20x1xf32>
    %160 = arith.mulf %159, %143 : vector<20x1xf32>
    %161 = vector.broadcast %160 : vector<20x1xf32> to vector<20x32xf32>
    %162 = arith.mulf %161, %135 : vector<20x32xf32>
    %163 = vector.shape_cast %157 : vector<20x1xf32> to vector<20x1xf32>
    %164 = vector.broadcast %163 : vector<20x1xf32> to vector<20x32xf32>
    %165 = arith.select %133, %164, %162 : vector<20x32xi1>, vector<20x32xf32>
    %166 = tpu.iota {dimensions = array<i32: 1>} : vector<20x32xi32>
    %c0_i32_56 = arith.constant 0 : i32
    %167 = vector.broadcast %c0_i32_56 : i32 to vector<20x32xi32>
    %168 = arith.cmpi eq, %166, %167 : vector<20x32xi32>
    %cst_57 = arith.constant 0.000000e+00 : f32
    %169 = vector.broadcast %cst_57 : f32 to vector<20x32xf32>
    %170 = arith.select %168, %169, %165 : vector<20x32xi1>, vector<20x32xf32>
    %171 = arith.mulf %170, %170 : vector<20x32xf32>
    %cst_58 = arith.constant dense<0.000000e+00> : vector<20xf32>
    %172 = vector.multi_reduction <add>, %171, %cst_58 [1] : vector<20x32xf32> to vector<20xf32>
    %173 = vector.shape_cast %172 : vector<20xf32> to vector<20x1xf32>
    %cst_59 = arith.constant 1.000000e+00 : f32
    %174 = vector.broadcast %cst_59 : f32 to vector<20x1xf32>
    %175 = arith.addf %174, %173 : vector<20x1xf32>
    %cst_60 = arith.constant 4.000000e-03 : f32
    %176 = vector.broadcast %cst_60 : f32 to vector<20x1xf32>
    %177 = arith.maximumf %175, %176 : vector<20x1xf32>
    %178 = math.sqrt %177 : vector<20x1xf32>
    %179 = vector.shape_cast %178 : vector<20x1xf32> to vector<20x1xf32>
    %180 = vector.broadcast %179 : vector<20x1xf32> to vector<20x32xf32>
    %181 = arith.select %168, %180, %165 : vector<20x32xi1>, vector<20x32xf32>
    %c248 = arith.constant 248 : index
    %c0_61 = arith.constant 0 : index
    %182 = vector.load %arg1[%c248, %c0_61] : memref<280x32xf32, #tpu.memory_space<vmem>>, vector<4x20xf32>
    %cst_62 = arith.constant dense<0.000000e+00> : vector<4x32xf32>
    %183 = tpu.matmul %182, %181, %cst_62 {dimension_numbers = #tpu.dot_dimension_numbers<[1], [0], [0], [1], [0, 0, 1, 1], [], []>} : vector<4x20xf32>, vector<20x32xf32>, vector<4x32xf32> -> vector<4x32xf32>
    %184 = vector.extract_strided_slice %183 {offsets = [0, 0], sizes = [2, 32], strides = [1, 1]} : vector<4x32xf32> to vector<2x32xf32>
    %185 = vector.extract_strided_slice %183 {offsets = [2, 0], sizes = [2, 32], strides = [1, 1]} : vector<4x32xf32> to vector<2x32xf32>
    %186 = tpu.concatenate %184, %185 in 1 : vector<2x32xf32>, vector<2x32xf32> -> vector<2x64xf32>
    %187 = tpu.iota {dimensions = array<i32: 1>} : vector<2x64xi32>
    %c0_i32_63 = arith.constant 0 : i32
    %188 = vector.broadcast %c0_i32_63 : i32 to vector<2x64xi32>
    %189 = arith.cmpi eq, %187, %188 : vector<2x64xi32>
    %cst_64 = arith.constant 0.000000e+00 : f32
    %190 = vector.broadcast %cst_64 : f32 to vector<2x64xf32>
    %191 = arith.select %189, %190, %186 : vector<2x64xi1>, vector<2x64xf32>
    %192 = arith.mulf %191, %191 : vector<2x64xf32>
    %cst_65 = arith.constant dense<0.000000e+00> : vector<2xf32>
    %193 = vector.multi_reduction <add>, %192, %cst_65 [1] : vector<2x64xf32> to vector<2xf32>
    %194 = vector.shape_cast %193 : vector<2xf32> to vector<2x1xf32>
    %195 = math.sqrt %194 : vector<2x1xf32>
    %cst_66 = arith.constant 1.000000e-15 : f32
    %196 = vector.broadcast %cst_66 : f32 to vector<2x1xf32>
    %197 = arith.maximumf %195, %196 : vector<2x1xf32>
    %198 = vector.extract_strided_slice %186 {offsets = [0, 0], sizes = [2, 1], strides = [1, 1]} : vector<2x64xf32> to vector<2x1xf32>
    %cst_67 = arith.constant 1.000000e+00 : f32
    %199 = vector.broadcast %cst_67 : f32 to vector<2x1xf32>
    %200 = arith.mulf %198, %199 : vector<2x1xf32>
    %cst_68 = arith.constant 1.004000e+00 : f32
    %201 = vector.broadcast %cst_68 : f32 to vector<2x1xf32>
    %202 = arith.maximumf %200, %201 : vector<2x1xf32>
    %203 = arith.mulf %202, %202 : vector<2x1xf32>
    %cst_69 = arith.constant 1.000000e+00 : f32
    %204 = vector.broadcast %cst_69 : f32 to vector<2x1xf32>
    %205 = arith.subf %203, %204 : vector<2x1xf32>
    %206 = math.sqrt %205 : vector<2x1xf32>
    %207 = arith.addf %202, %206 : vector<2x1xf32>
    %208 = math.log %207 : vector<2x1xf32>
    %cst_70 = arith.constant 1.000000e+00 : f32
    %209 = vector.broadcast %cst_70 : f32 to vector<2x1xf32>
    %210 = arith.mulf %209, %208 : vector<2x1xf32>
    %211 = arith.divf %210, %197 : vector<2x1xf32>
    %212 = vector.broadcast %211 : vector<2x1xf32> to vector<2x64xf32>
    %213 = arith.mulf %212, %191 : vector<2x64xf32>
    %cst_71 = arith.constant 0.000000e+00 : f32
    %214 = vector.broadcast %cst_71 : f32 to vector<2x64xf32>
    %215 = arith.select %189, %214, %213 : vector<2x64xi1>, vector<2x64xf32>
    %c136 = arith.constant 136 : index
    %c0_72 = arith.constant 0 : index
    %216 = vector.load %arg1[%c136, %c0_72] : memref<280x32xf32, #tpu.memory_space<vmem>>, vector<64x32xf32>
    %c200 = arith.constant 200 : index
    %c0_73 = arith.constant 0 : index
    %217 = vector.load %arg1[%c200, %c0_73] : memref<280x32xf32, #tpu.memory_space<vmem>>, vector<1x32xf32>
    %cst_74 = arith.constant dense<0.000000e+00> : vector<2x32xf32>
    %218 = tpu.matmul %215, %216, %cst_74 {dimension_numbers = #tpu.dot_dimension_numbers<[1], [0], [0], [1], [0, 0, 1, 1], [], []>} : vector<2x64xf32>, vector<64x32xf32>, vector<2x32xf32> -> vector<2x32xf32>
    %219 = vector.broadcast %217 : vector<1x32xf32> to vector<2x32xf32>
    %220 = arith.addf %218, %219 : vector<2x32xf32>
    %cst_75 = arith.constant 0.000000e+00 : f32
    %221 = vector.broadcast %cst_75 : f32 to vector<2x32xf32>
    %222 = arith.maximumf %220, %221 : vector<2x32xf32>
    %c208 = arith.constant 208 : index
    %c0_76 = arith.constant 0 : index
    %223 = vector.load %arg1[%c208, %c0_76] : memref<280x32xf32, #tpu.memory_space<vmem>>, vector<32x10xf32>
    %c240 = arith.constant 240 : index
    %c0_77 = arith.constant 0 : index
    %224 = vector.load %arg1[%c240, %c0_77] : memref<280x32xf32, #tpu.memory_space<vmem>>, vector<1x10xf32>
    %cst_78 = arith.constant dense<0.000000e+00> : vector<2x10xf32>
    %225 = tpu.matmul %222, %223, %cst_78 {dimension_numbers = #tpu.dot_dimension_numbers<[1], [0], [0], [1], [0, 0, 1, 1], [], []>} : vector<2x32xf32>, vector<32x10xf32>, vector<2x10xf32> -> vector<2x10xf32>
    %226 = vector.broadcast %224 : vector<1x10xf32> to vector<2x10xf32>
    %227 = arith.addf %225, %226 : vector<2x10xf32>
    %cst_79 = arith.constant dense<0xFF800000> : vector<2xf32>
    %228 = vector.multi_reduction <maximumf>, %227, %cst_79 [1] : vector<2x10xf32> to vector<2xf32>
    %229 = vector.shape_cast %228 : vector<2xf32> to vector<2x1xf32>
    %230 = vector.broadcast %229 : vector<2x1xf32> to vector<2x10xf32>
    %231 = arith.subf %227, %230 : vector<2x10xf32>
    %232 = math.exp %231 : vector<2x10xf32>
    %cst_80 = arith.constant dense<0.000000e+00> : vector<2xf32>
    %233 = vector.multi_reduction <add>, %232, %cst_80 [1] : vector<2x10xf32> to vector<2xf32>
    %234 = vector.shape_cast %233 : vector<2xf32> to vector<2x1xf32>
    %235 = math.log %234 : vector<2x1xf32>
    %236 = vector.broadcast %235 : vector<2x1xf32> to vector<2x10xf32>
    %237 = arith.subf %231, %236 : vector<2x10xf32>
    %c0_81 = arith.constant 0 : index
    %c0_82 = arith.constant 0 : index
    %238 = vector.load %arg2[%c0_81, %c0_82] : memref<2x10xf32, #tpu.memory_space<vmem>>, vector<2x10xf32>
    tpu.vector_store %arg2[%c0_81, %c0_82], %237 {strides = array<i32>} : memref<2x10xf32, #tpu.memory_space<vmem>>, vector<2x10xf32>,
    return
  }
}

</mosaic_0001>

<llo_original>
// kernel: hypergraph_transformer_forward.1
$region0: #{hypergraph_transformer_forward.1}
  #allocation0 [shape = 'u32[]', space=smem, size = 0x4, offset = 0x4, fixed_abs, tag = 'smem constant byte address 0x4 - core index']
  #allocation1 [shape = 'u32[144,128]{1,0:T(1,128)}', space=vmem, size = 0x12000, scoped, tag = 'internal scratch']
  %s0 = inlined_call_operand.vmem [shape: f32[20,112], index: 0, kind: input, shape index: {}]
  %s1 = inlined_call_operand.vmem [shape: f32[280,32], index: 1, kind: input, shape index: {}]
  %s2 = inlined_call_operand.hbm [shape: f32[2,10], index: 2, kind: output, shape index: {}]
  %s3 = sld [smem:[#allocation0]]
  $region18: #{hypergraph_transformer_forward.1} parent=0
    _
  %s5 = ssub.s32 1, %s3
  %s6 = scalar_select 0, %s5, %s3
  $region1: #{hypergraph_transformer_forward.1} parent=0
    #allocation2 [shape = 'u8[1024]{0}', space=vmem, size = 0x400, scoped, tag = 'output window, operand 0, single buffered']
    #allocation3 [shape = 's32[1]{0}', space=sflag, size = 0x4, scoped, tag = 'scoped memory for hypergraph_transformer_forward.1']
    %7 = vsyncpa [#allocation3], 0
    // Predicated region
    $region2: #{hypergraph_transformer_forward.1} parent=1 // pred_check
      _
    $region3: #{hypergraph_transformer_forward.1} parent=1 // pred_check_branch
      %9 = sbr.rel (0) target = $region5
    $region4: #{hypergraph_transformer_forward.1} parent=1 // pred_region
      _
    $region5: #{hypergraph_transformer_forward.1} parent=1 // pred_fallthru
      _
    // Predicated region
    $region6: #{hypergraph_transformer_forward.1} parent=1 // pred_check
      _
    $region7: #{hypergraph_transformer_forward.1} parent=1 // pred_check_branch
      %11 = sbr.rel (0) target = $region9
    $region8: #{hypergraph_transformer_forward.1} parent=1 // pred_region
      _
    $region9: #{hypergraph_transformer_forward.1} parent=1 // pred_fallthru
      _
    %v12 = vld [vmem:[%s0] sm:$0xff]
    %v13 = vld [vmem:[%s0 + $0x8] sm:$0xff]
    %v14 = vld [vmem:[%s0 + $0x10] sm:$0xf]
    %v15 = vld [vmem:[%s1] sm:$0xff]
    %v16 = vld [vmem:[%s1 + $0x8] sm:$0xff]
    %v17 = vld [vmem:[%s1 + $0x10] sm:$0xff]
    %v18 = vld [vmem:[%s1 + $0x18] sm:$0xff]
    %v19 = vld [vmem:[%s1 + $0x20] sm:$0xff]
    %v20 = vld [vmem:[%s1 + $0x28] sm:$0xff]
    %v21 = vld [vmem:[%s1 + $0x30] sm:$0xff]
    %v22 = vld [vmem:[%s1 + $0x38] sm:$0xff]
    %v23 = vld [vmem:[%s1 + $0x40] sm:$0xff]
    %v24 = vld [vmem:[%s1 + $0x48] sm:$0xff]
    %v25 = vld [vmem:[%s1 + $0x50] sm:$0xff]
    %v26 = vld [vmem:[%s1 + $0x58] sm:$0xff]
    %v27 = vld [vmem:[%s1 + $0x60] sm:$0xff]
    %v28 = vld [vmem:[%s1 + $0x68] sm:$0xff]
    %v29 = vld [vmem:[%s1 + $0x70] sm:$0xff]
    %v30 = vld [vmem:[%s1 + $0x78] sm:$0xff]
    %v31 = vld [vmem:[%s1 + $0x80] sm:$0xf]
    %vm32 = vcmask 916480
    %v34 = vsel %vm32, %v12, 0
    %v37 = vsel %vm32, %v13, 0
    %v40 = vsel %vm32, %v14, 0
    %42 = vmatprep.subr.mxu0 0.0
    %43 = vmatpush1.msra.mxu0 %v15
    %44 = vmatprep.subr.mxu0 0.0
    %45 = vmatpush1.msra.mxu0 %v16
    %46 = vmatprep.subr.mxu0 0.0
    %47 = vmatpush1.msra.mxu0 %v17
    %48 = vmatprep.subr.mxu0 0.0
    %49 = vmatpush1.msra.mxu0 %v18
    %50 = vmatprep.subr.mxu0 0.0
    %51 = vmatpush1.msra.mxu0 %v19
    %52 = vmatprep.subr.mxu0 0.0
    %53 = vmatpush1.msra.mxu0 %v20
    %54 = vmatprep.subr.mxu0 0.0
    %55 = vmatpush1.msra.mxu0 %v21
    %56 = vmatprep.subr.mxu0 0.0
    %57 = vmatpush1.msra.mxu0 %v22
    %58 = vmatprep.subr.mxu0 0.0
    %59 = vmatpush1.msra.mxu0 %v23
    %60 = vmatprep.subr.mxu0 0.0
    %61 = vmatpush1.msra.mxu0 %v24
    %62 = vmatprep.subr.mxu0 0.0
    %63 = vmatpush1.msra.mxu0 %v25
    %64 = vmatprep.subr.mxu0 0.0
    %65 = vmatpush1.msra.mxu0 %v26
    %66 = vmatprep.subr.mxu0 0.0
    %67 = vmatpush1.msra.mxu0 %v27
    %68 = vmatprep.subr.mxu0 0.0
    %69 = vmatpush1.msra.mxu0 %v28
    %70 = vmatprep.subr.mxu0 0.0
    %71 = vmatpush1.msra.mxu0 0.0
    %72 = vmatprep.subr.mxu0 0.0
    %73 = vmatpush1.msra.mxu0 0.0
    %74 = vmatprep.subr.mxu0 0.0
    %75 = vmatpush1.msra.mxu0 0.0
    %76 = vmatprep.subr.mxu0 0.0
    %77 = vmatpush1.msra.mxu0 0.0
    %78 = vmatprep.subr.mxu0 0.0
    %79 = vmatpush1.msra.mxu0 0.0
    %80 = vmatprep.subr.mxu0 0.0
    %81 = vmatpush1.msra.mxu0 0.0
    %82 = vmatprep.subr.mxu0 0.0
    %83 = vmatpush1.msra.mxu0 0.0
    %84 = vmatprep.subr.mxu0 0.0
    %85 = vmatpush1.msra.mxu0 0.0
    %86 = vmatprep.subr.mxu0 0.0
    %87 = vmatpush1.msra.mxu0 0.0
    %88 = vmatprep.subr.mxu0 0.0
    %89 = vmatpush1.msra.mxu0 0.0
    %90 = vmatprep.subr.mxu0 0.0
    %91 = vmatpush1.msra.mxu0 0.0
    %92 = vmatprep.subr.mxu0 0.0
    %93 = vmatpush1.msra.mxu0 0.0
    %94 = vmatprep.subr.mxu0 0.0
    %95 = vmatpush1.msra.mxu0 0.0
    %96 = vmatprep.subr.mxu0 0.0
    %97 = vmatpush1.msra.mxu0 0.0
    %98 = vmatprep.subr.mxu0 0.0
    %99 = vmatpush1.msra.mxu0 0.0
    %100 = vmatprep.subr.mxu0 0.0
    %101 = vmatpush1.msra.mxu0 0.0
    %102 = vmatprep.subr.mxu0 0.0
    %103 = vmatpush1.msra.mxu0 0.0
    %104 = vmatprep.subr.mxu0 0.0
    %105 = vmatpush1.msra.mxu0 0.0
    %106 = vmatprep.mubr.f32.mxu0 0.0
    %107 = vmatmul.mubr.f32.gmra.mrb[0].mxu0 %v34
    %v108 = vpop.f32.mrb[0].mxu0
    %v109 = vadd.f32 %v29, %v108
    %v110 = vpop.f32.mrb[0].mxu0
    %111 = vmatprep.mubr.f32.mxu0 0.0
    %112 = vmatmul.mubr.f32.gmra.mrb[0].mxu0 %v37
    %v113 = vpop.f32.mrb[0].mxu0
    %v114 = vadd.f32 %v30, %v113
    %v115 = vpop.f32.mrb[0].mxu0
    %116 = vmatprep.mubr.f32.mxu0 0.0
    %117 = vmatmul.mubr.f32.gmra.mrb[0].mxu0 %v40
    %v118 = vpop.f32.mrb[0].mxu0
    %v119 = vadd.f32 %v31, %v118
    %v120 = vpop.f32.mrb[0].mxu0
    %121 = vdwg.mxu0
    %v122 = vlaneseq
    %v123 = vand.u32 %v122, 127
    %vm124 = vcmp.eq.s32.totalorder %v123, 0
    %v125 = vsel %vm124, 0.0, %v109
    %v126 = vsel %vm124, 0.0, %v114
    %v127 = vsel %vm124, 0.0, %v119
    %v128 = vmul.f32 %v125, %v125
    %v129 = vmul.f32 %v126, %v126
    %v130 = vmul.f32 %v127, %v127
    %vm131 = vcmask 261120
    %v132 = vsel %vm131, %v128, 0.0
    %133 = vadd.xlane.f32.xlu0 %v132
    %v134 = vpop.xlane.xlu0 %133
    %v135 = vsel %vm131, %v129, 0.0
    %136 = vadd.xlane.f32.xlu0 %v135
    %v137 = vpop.xlane.xlu0 %136
    %vm138 = vcmask 257024
    %v139 = vsel %vm138, %v130, 0.0
    %140 = vadd.xlane.f32.xlu0 %v139
    %v141 = vpop.xlane.xlu0 %140
    %v142 = vrsqrt.pop %v134
    %v143 = vmul.f32 %v134, %v142
    %vm144 = vcmp.eq.f32.partialorder %v134, inf
    %v145 = vsel %vm144, %v134, %v143
    %vm146 = vcmp.eq.f32.partialorder %v134, 0.0
    %v147 = vand.u32 %v134, 2147483648
    %v148 = vsel %vm146, %v147, %v145
    %v149 = vrsqrt.pop %v137
    %v150 = vmul.f32 %v137, %v149
    %vm151 = vcmp.eq.f32.partialorder %v137, inf
    %v152 = vsel %vm151, %v137, %v150
    %vm153 = vcmp.eq.f32.partialorder %v137, 0.0
    %v154 = vand.u32 %v137, 2147483648
    %v155 = vsel %vm153, %v154, %v152
    %v156 = vrsqrt.pop %v141
    %v157 = vmul.f32 %v141, %v156
    %vm158 = vcmp.eq.f32.partialorder %v141, inf
    %v159 = vsel %vm158, %v141, %v157
    %vm160 = vcmp.eq.f32.partialorder %v141, 0.0
    %v161 = vand.u32 %v141, 2147483648
    %v162 = vsel %vm160, %v161, %v159
    %v163 = vmax.f32 %v148, 1e-15
    %v164 = vmax.f32 %v155, 1e-15
    %v165 = vmax.f32 %v162, 1e-15
    %v166 = vrcp.pop %v163
    %v167 = vmul.f32 1.0, %v166
    %v168 = vrcp.pop %v164
    %v169 = vmul.f32 1.0, %v168
    %v170 = vrcp.pop %v165
    %v171 = vmul.f32 1.0, %v170
    %v172 = vmul.f32 %v163, 1.442695
    %v173 = vpow.pop %v172
    %v174 = vmul.f32 %v164, 1.442695
    %v175 = vpow.pop %v174
    %v176 = vmul.f32 %v165, 1.442695
    %v177 = vpow.pop %v176
    %v178 = vsub.f32 0.0, %v163
    %v179 = vsub.f32 0.0, %v164
    %v180 = vsub.f32 0.0, %v165
    %v181 = vmul.f32 %v178, 1.442695
    %v182 = vpow.pop %v181
    %v183 = vmul.f32 %v179, 1.442695
    %v184 = vpow.pop %v183
    %v185 = vmul.f32 %v180, 1.442695
    %v186 = vpow.pop %v185
    %v187 = vsub.f32 %v173, %v182
    %v188 = vsub.f32 %v175, %v184
    %v189 = vsub.f32 %v177, %v186
    %v190 = vmul.f32 %v187, 0.5
    %v191 = vmul.f32 %v188, 0.5
    %v192 = vmul.f32 %v189, 0.5
    %v193 = vmul.f32 %v190, %v167
    %v194 = vmul.f32 %v191, %v169
    %v195 = vmul.f32 %v192, %v171
    %v196 = vmul.f32 %v193, %v125
    %v197 = vmul.f32 %v194, %v126
    %v198 = vmul.f32 %v195, %v127
    %v199 = vsel %vm124, 0.0, %v196
    %v200 = vsel %vm124, 0.0, %v197
    %v201 = vsel %vm124, 0.0, %v198
    %v202 = vmul.f32 %v199, %v199
    %v203 = vmul.f32 %v200, %v200
    %v204 = vmul.f32 %v201, %v201
    %v205 = vsel %vm131, %v202, 0.0
    %206 = vadd.xlane.f32.xlu0 %v205
    %v207 = vpop.xlane.xlu0 %206
    %v208 = vsel %vm131, %v203, 0.0
    %209 = vadd.xlane.f32.xlu0 %v208
    %v210 = vpop.xlane.xlu0 %209
    %v211 = vsel %vm138, %v204, 0.0
    %212 = vadd.xlane.f32.xlu0 %v211
    %v213 = vpop.xlane.xlu0 %212
    %v214 = vadd.f32 %v207, 1.0
    %v215 = vadd.f32 %v210, 1.0
    %v216 = vadd.f32 %v213, 1.0
    %v217 = vmax.f32 %v214, 0.004
    %v218 = vmax.f32 %v215, 0.004
    %v219 = vmax.f32 %v216, 0.004
    %v220 = vrsqrt.pop %v217
    %v221 = vmul.f32 %v217, %v220
    %vm222 = vcmp.eq.f32.partialorder %v217, inf
    %v223 = vsel %vm222, %v217, %v221
    %vm224 = vcmp.eq.f32.partialorder %v217, 0.0
    %v225 = vand.u32 %v217, 2147483648
    %v226 = vsel %vm224, %v225, %v223
    %v227 = vrsqrt.pop %v218
    %v228 = vmul.f32 %v218, %v227
    %vm229 = vcmp.eq.f32.partialorder %v218, inf
    %v230 = vsel %vm229, %v218, %v228
    %vm231 = vcmp.eq.f32.partialorder %v218, 0.0
    %v232 = vand.u32 %v218, 2147483648
    %v233 = vsel %vm231, %v232, %v230
    %v234 = vrsqrt.pop %v219
    %v235 = vmul.f32 %v219, %v234
    %vm236 = vcmp.eq.f32.partialorder %v219, inf
    %v237 = vsel %vm236, %v219, %v235
    %vm238 = vcmp.eq.f32.partialorder %v219, 0.0
    %v239 = vand.u32 %v219, 2147483648
    %v240 = vsel %vm238, %v239, %v237
    %v241 = vsel %vm124, %v226, %v196
    %v242 = vsel %vm124, %v233, %v197
    %v243 = vsel %vm124, %v240, %v198
    %v244 = vrsqrt.pop %v207
    %v245 = vmul.f32 %v207, %v244
    %vm246 = vcmp.eq.f32.partialorder %v207, inf
    %v247 = vsel %vm246, %v207, %v245
    %vm248 = vcmp.eq.f32.partialorder %v207, 0.0
    %v249 = vand.u32 %v207, 2147483648
    %v250 = vsel %vm248, %v249, %v247
    %v251 = vrsqrt.pop %v210
    %v252 = vmul.f32 %v210, %v251
    %vm253 = vcmp.eq.f32.partialorder %v210, inf
    %v254 = vsel %vm253, %v210, %v252
    %vm255 = vcmp.eq.f32.partialorder %v210, 0.0
    %v256 = vand.u32 %v210, 2147483648
    %v257 = vsel %vm255, %v256, %v254
    %v258 = vrsqrt.pop %v213
    %v259 = vmul.f32 %v213, %v258
    %vm260 = vcmp.eq.f32.partialorder %v213, inf
    %v261 = vsel %vm260, %v213, %v259
    %vm262 = vcmp.eq.f32.partialorder %v213, 0.0
    %v263 = vand.u32 %v213, 2147483648
    %v264 = vsel %vm262, %v263, %v261
    %v265 = vmax.f32 %v250, 1e-15
    %v266 = vmax.f32 %v257, 1e-15
    %v267 = vmax.f32 %v264, 1e-15
    %v268 = vmax.f32 %v241, 1.004
    %v269 = vmax.f32 %v242, 1.004
    %v270 = vmax.f32 %v243, 1.004
    %v271 = vmul.f32 %v268, %v268
    %v272 = vmul.f32 %v269, %v269
    %v273 = vmul.f32 %v270, %v270
    %v274 = vsub.f32 %v271, 1.0
    %v275 = vsub.f32 %v272, 1.0
    %v276 = vsub.f32 %v273, 1.0
    %v277 = vrsqrt.pop %v274
    %v278 = vmul.f32 %v274, %v277
    %vm279 = vcmp.eq.f32.partialorder %v274, inf
    %v280 = vsel %vm279, %v274, %v278
    %vm281 = vcmp.eq.f32.partialorder %v274, 0.0
    %v282 = vand.u32 %v274, 2147483648
    %v283 = vsel %vm281, %v282, %v280
    %v284 = vrsqrt.pop %v275
    %v285 = vmul.f32 %v275, %v284
    %vm286 = vcmp.eq.f32.partialorder %v275, inf
    %v287 = vsel %vm286, %v275, %v285
    %vm288 = vcmp.eq.f32.partialorder %v275, 0.0
    %v289 = vand.u32 %v275, 2147483648
    %v290 = vsel %vm288, %v289, %v287
    %v291 = vrsqrt.pop %v276
    %v292 = vmul.f32 %v276, %v291
    %vm293 = vcmp.eq.f32.partialorder %v276, inf
    %v294 = vsel %vm293, %v276, %v292
    %vm295 = vcmp.eq.f32.partialorder %v276, 0.0
    %v296 = vand.u32 %v276, 2147483648
    %v297 = vsel %vm295, %v296, %v294
    %v298 = vadd.f32 %v268, %v283
    %v299 = vadd.f32 %v269, %v290
    %v300 = vadd.f32 %v270, %v297
    %v301 = vlog2.pop %v298
    %v302 = vmul.f32 %v301, 0.6931472
    %v303 = vlog2.pop %v299
    %v304 = vmul.f32 %v303, 0.6931472
    %v305 = vlog2.pop %v300
    %v306 = vmul.f32 %v305, 0.6931472
    %v307 = vrcp.pop %v265
    %v308 = vmul.f32 %v302, %v307
    %v309 = vrcp.pop %v266
    %v310 = vmul.f32 %v304, %v309
    %v311 = vrcp.pop %v267
    %v312 = vmul.f32 %v306, %v311
    %314 = vset.pattern.permute.xlu0 0
    %315 = vperm.xlu0 %314, %v308
    %v316 = vpop.permute.xlu0 %315
    %319 = vset.pattern.permute.xlu0 0
    %320 = vperm.xlu0 %319, %v310
    %v321 = vpop.permute.xlu0 %320
    %324 = vset.pattern.permute.xlu0 0
    %325 = vperm.xlu0 %324, %v312
    %v326 = vpop.permute.xlu0 %325
    %v328 = vmul.f32 %v316, %v199
    %v329 = vmul.f32 %v321, %v200
    %v330 = vmul.f32 %v326, %v201
    %v331 = vsel %vm124, 0.0, %v328
    %v332 = vsel %vm124, 0.0, %v329
    %v333 = vsel %vm124, 0.0, %v330
    %v334 = vld [vmem:[%s1 + $0x100] sm:$0xff]
    %v335 = vld [vmem:[%s1 + $0x108] sm:$0xff]
    %v336 = vld [vmem:[%s1 + $0x110] sm:$0xf]
    %v338 = vsel %vm131, %v331, 0
    %v341 = vsel %vm131, %v332, 0
    %v344 = vsel %vm131, %v333, 0
    %346 = vmatprep.subr.mxu0 0.0
    %347 = vmatpush1.xpose.msra.mxu0 %v338
    %348 = vmatprep.subr.mxu0 0.0
    %349 = vmatpush1.xpose.msra.mxu0 %v341
    %350 = vmatprep.subr.mxu0 0.0
    %351 = vmatpush1.xpose.msra.mxu0 %v344
    %352 = vmatprep.subr.mxu0 0.0
    %353 = vmatpush1.xpose.msra.mxu0 0.0
    %354 = vmatprep.subr.mxu0 0.0
    %355 = vmatpush1.xpose.msra.mxu0 0.0
    %356 = vmatprep.subr.mxu0 0.0
    %357 = vmatpush1.xpose.msra.mxu0 0.0
    %358 = vmatprep.subr.mxu0 0.0
    %359 = vmatpush1.xpose.msra.mxu0 0.0
    %360 = vmatprep.subr.mxu0 0.0
    %361 = vmatpush1.xpose.msra.mxu0 0.0
    %362 = vmatprep.subr.mxu0 0.0
    %363 = vmatpush1.xpose.msra.mxu0 0.0
    %364 = vmatprep.subr.mxu0 0.0
    %365 = vmatpush1.xpose.msra.mxu0 0.0
    %366 = vmatprep.subr.mxu0 0.0
    %367 = vmatpush1.xpose.msra.mxu0 0.0
    %368 = vmatprep.subr.mxu0 0.0
    %369 = vmatpush1.xpose.msra.mxu0 0.0
    %370 = vmatprep.subr.mxu0 0.0
    %371 = vmatpush1.xpose.msra.mxu0 0.0
    %372 = vmatprep.subr.mxu0 0.0
    %373 = vmatpush1.xpose.msra.mxu0 0.0
    %374 = vmatprep.subr.mxu0 0.0
    %375 = vmatpush1.xpose.msra.mxu0 0.0
    %376 = vmatprep.subr.mxu0 0.0
    %377 = vmatpush1.xpose.msra.mxu0 0.0
    %378 = vmatprep.subr.mxu0 0.0
    %379 = vmatpush1.xpose.msra.mxu0 0.0
    %380 = vmatprep.subr.mxu0 0.0
    %381 = vmatpush1.xpose.msra.mxu0 0.0
    %382 = vmatprep.subr.mxu0 0.0
    %383 = vmatpush1.xpose.msra.mxu0 0.0
    %384 = vmatprep.subr.mxu0 0.0
    %385 = vmatpush1.xpose.msra.mxu0 0.0
    %386 = vmatprep.subr.mxu0 0.0
    %387 = vmatpush1.xpose.msra.mxu0 0.0
    %388 = vmatprep.subr.mxu0 0.0
    %389 = vmatpush1.xpose.msra.mxu0 0.0
    %390 = vmatprep.subr.mxu0 0.0
    %391 = vmatpush1.xpose.msra.mxu0 0.0
    %392 = vmatprep.subr.mxu0 0.0
    %393 = vmatpush1.xpose.msra.mxu0 0.0
    %394 = vmatprep.subr.mxu0 0.0
    %395 = vmatpush1.xpose.msra.mxu0 0.0
    %396 = vmatprep.subr.mxu0 0.0
    %397 = vmatpush1.xpose.msra.mxu0 0.0
    %398 = vmatprep.subr.mxu0 0.0
    %399 = vmatpush1.xpose.msra.mxu0 0.0
    %400 = vmatprep.subr.mxu0 0.0
    %401 = vmatpush1.xpose.msra.mxu0 0.0
    %402 = vmatprep.subr.mxu0 0.0
    %403 = vmatpush1.xpose.msra.mxu0 0.0
    %404 = vmatprep.subr.mxu0 0.0
    %405 = vmatpush1.xpose.msra.mxu0 0.0
    %406 = vmatprep.subr.mxu0 0.0
    %407 = vmatpush1.xpose.msra.mxu0 0.0
    %408 = vmatprep.subr.mxu0 0.0
    %409 = vmatpush1.xpose.msra.mxu0 0.0
    %410 = vmatprep.mubr.f32.mxu0 0.0
    %411 = vmatmul.mubr.f32.gmra.mrb[0].mxu0 %v338
    %v412 = vpop.f32.mrb[0].mxu0
    %v413 = vadd.f32 0.0, %v412
    %v414 = vpop.f32.mrb[0].mxu0
    %415 = vmatprep.mubr.f32.mxu0 0.0
    %416 = vmatmul.mubr.f32.gmra.mrb[0].mxu0 %v341
    %v417 = vpop.f32.mrb[0].mxu0
    %v418 = vadd.f32 0.0, %v417
    %v419 = vpop.f32.mrb[0].mxu0
    %420 = vmatprep.mubr.f32.mxu0 0.0
    %421 = vmatmul.mubr.f32.gmra.mrb[0].mxu0 %v344
    %v422 = vpop.f32.mrb[0].mxu0
    %v423 = vadd.f32 0.0, %v422
    %v424 = vpop.f32.mrb[0].mxu0
    %425 = vdwg.mxu0
    %v426 = vmul.f32 %v413, 0.17677669
    %v427 = vmul.f32 %v418, 0.17677669
    %v428 = vmul.f32 %v423, 0.17677669
    %v429 = vadd.f32 %v426, %v334
    %v430 = vadd.f32 %v427, %v335
    %v431 = vadd.f32 %v428, %v336
    %vm432 = vcmask 162816
    %v433 = vsel %vm432, %v429, -inf
    %434 = vmax.xlane.f32.xlu0 %v433
    %v435 = vpop.xlane.xlu0 %434
    %v436 = vsel %vm432, %v430, -inf
    %437 = vmax.xlane.f32.xlu0 %v436
    %v438 = vpop.xlane.xlu0 %437
    %vm439 = vcmask 158720
    %v440 = vsel %vm439, %v431, -inf
    %441 = vmax.xlane.f32.xlu0 %v440
    %v442 = vpop.xlane.xlu0 %441
    %v443 = vsub.f32 %v429, %v435
    %v444 = vsub.f32 %v430, %v438
    %v445 = vsub.f32 %v431, %v442
    %v446 = vmul.f32 %v443, 1.442695
    %v447 = vpow.pop %v446
    %v448 = vmul.f32 %v444, 1.442695
    %v449 = vpow.pop %v448
    %v450 = vmul.f32 %v445, 1.442695
    %v451 = vpow.pop %v450
    %v452 = vsel %vm432, %v447, 0.0
    %453 = vadd.xlane.f32.xlu0 %v452
    %v454 = vpop.xlane.xlu0 %453
    %v455 = vsel %vm432, %v449, 0.0
    %456 = vadd.xlane.f32.xlu0 %v455
    %v457 = vpop.xlane.xlu0 %456
    %v458 = vsel %vm439, %v451, 0.0
    %459 = vadd.xlane.f32.xlu0 %v458
    %v460 = vpop.xlane.xlu0 %459
    %v461 = vrcp.pop %v454
    %v462 = vrcp.pop %v457
    %v463 = vrcp.pop %v460
    %v464 = vmul.f32 %v447, %v461
    %v465 = vmul.f32 %v449, %v462
    %v466 = vmul.f32 %v451, %v463
    %v468 = vsel %vm432, %v464, 0
    %v471 = vsel %vm432, %v465, 0
    %v474 = vsel %vm432, %v466, 0
    %vm476 = vcmask 1043456
    %v477 = vsel %vm476, %v333, 0
    %479 = vmatprep.subr.mxu0 0.0
    %480 = vmatpush1.msra.mxu0 %v331
    %481 = vmatprep.subr.mxu0 0.0
    %482 = vmatpush1.msra.mxu0 %v332
    %483 = vmatprep.subr.mxu0 0.0
    %484 = vmatpush1.msra.mxu0 %v477
    %485 = vmatprep.subr.mxu0 0.0
    %486 = vmatpush1.msra.mxu0 0.0
    %487 = vmatprep.subr.mxu0 0.0
    %488 = vmatpush1.msra.mxu0 0.0
    %489 = vmatprep.subr.mxu0 0.0
    %490 = vmatpush1.msra.mxu0 0.0
    %491 = vmatprep.subr.mxu0 0.0
    %492 = vmatpush1.msra.mxu0 0.0
    %493 = vmatprep.subr.mxu0 0.0
    %494 = vmatpush1.msra.mxu0 0.0
    %495 = vmatprep.subr.mxu0 0.0
    %496 = vmatpush1.msra.mxu0 0.0
    %497 = vmatprep.subr.mxu0 0.0
    %498 = vmatpush1.msra.mxu0 0.0
    %499 = vmatprep.subr.mxu0 0.0
    %500 = vmatpush1.msra.mxu0 0.0
    %501 = vmatprep.subr.mxu0 0.0
    %502 = vmatpush1.msra.mxu0 0.0
    %503 = vmatprep.subr.mxu0 0.0
    %504 = vmatpush1.msra.mxu0 0.0
    %505 = vmatprep.subr.mxu0 0.0
    %506 = vmatpush1.msra.mxu0 0.0
    %507 = vmatprep.subr.mxu0 0.0
    %508 = vmatpush1.msra.mxu0 0.0
    %509 = vmatprep.subr.mxu0 0.0
    %510 = vmatpush1.msra.mxu0 0.0
    %511 = vmatprep.subr.mxu0 0.0
    %512 = vmatpush1.msra.mxu0 0.0
    %513 = vmatprep.subr.mxu0 0.0
    %514 = vmatpush1.msra.mxu0 0.0
    %515 = vmatprep.subr.mxu0 0.0
    %516 = vmatpush1.msra.mxu0 0.0
    %517 = vmatprep.subr.mxu0 0.0
    %518 = vmatpush1.msra.mxu0 0.0
    %519 = vmatprep.subr.mxu0 0.0
    %520 = vmatpush1.msra.mxu0 0.0
    %521 = vmatprep.subr.mxu0 0.0
    %522 = vmatpush1.msra.mxu0 0.0
    %523 = vmatprep.subr.mxu0 0.0
    %524 = vmatpush1.msra.mxu0 0.0
    %525 = vmatprep.subr.mxu0 0.0
    %526 = vmatpush1.msra.mxu0 0.0
    %527 = vmatprep.subr.mxu0 0.0
    %528 = vmatpush1.msra.mxu0 0.0
    %529 = vmatprep.subr.mxu0 0.0
    %530 = vmatpush1.msra.mxu0 0.0
    %531 = vmatprep.subr.mxu0 0.0
    %532 = vmatpush1.msra.mxu0 0.0
    %533 = vmatprep.subr.mxu0 0.0
    %534 = vmatpush1.msra.mxu0 0.0
    %535 = vmatprep.subr.mxu0 0.0
    %536 = vmatpush1.msra.mxu0 0.0
    %537 = vmatprep.subr.mxu0 0.0
    %538 = vmatpush1.msra.mxu0 0.0
    %539 = vmatprep.subr.mxu0 0.0
    %540 = vmatpush1.msra.mxu0 0.0
    %541 = vmatprep.subr.mxu0 0.0
    %542 = vmatpush1.msra.mxu0 0.0
    %543 = vmatprep.mubr.f32.mxu0 0.0
    %544 = vmatmul.mubr.f32.gmra.mrb[0].mxu0 %v468
    %v545 = vpop.f32.mrb[0].mxu0
    %v546 = vadd.f32 0.0, %v545
    %v547 = vpop.f32.mrb[0].mxu0
    %548 = vmatprep.mubr.f32.mxu0 0.0
    %549 = vmatmul.mubr.f32.gmra.mrb[0].mxu0 %v471
    %v550 = vpop.f32.mrb[0].mxu0
    %v551 = vadd.f32 0.0, %v550
    %v552 = vpop.f32.mrb[0].mxu0
    %553 = vmatprep.mubr.f32.mxu0 0.0
    %554 = vmatmul.mubr.f32.gmra.mrb[0].mxu0 %v474
    %v555 = vpop.f32.mrb[0].mxu0
    %v556 = vadd.f32 0.0, %v555
    %v557 = vpop.f32.mrb[0].mxu0
    %558 = vdwg.mxu0
    %v559 = vsel %vm124, 0.0, %v546
    %v560 = vsel %vm124, 0.0, %v551
    %v561 = vsel %vm124, 0.0, %v556
    %v563 = vsel %vm131, %v559, 0
    %v566 = vsel %vm131, %v560, 0
    %v569 = vsel %vm131, %v561, 0
    %571 = vmatprep.subr.mxu0 0.0
    %572 = vmatpush1.xpose.msra.mxu0 %v563
    %573 = vmatprep.subr.mxu0 0.0
    %574 = vmatpush1.xpose.msra.mxu0 %v566
    %575 = vmatprep.subr.mxu0 0.0
    %576 = vmatpush1.xpose.msra.mxu0 %v569
    %577 = vmatprep.subr.mxu0 0.0
    %578 = vmatpush1.xpose.msra.mxu0 0.0
    %579 = vmatprep.subr.mxu0 0.0
    %580 = vmatpush1.xpose.msra.mxu0 0.0
    %581 = vmatprep.subr.mxu0 0.0
    %582 = vmatpush1.xpose.msra.mxu0 0.0
    %583 = vmatprep.subr.mxu0 0.0
    %584 = vmatpush1.xpose.msra.mxu0 0.0
    %585 = vmatprep.subr.mxu0 0.0
    %586 = vmatpush1.xpose.msra.mxu0 0.0
    %587 = vmatprep.subr.mxu0 0.0
    %588 = vmatpush1.xpose.msra.mxu0 0.0
    %589 = vmatprep.subr.mxu0 0.0
    %590 = vmatpush1.xpose.msra.mxu0 0.0
    %591 = vmatprep.subr.mxu0 0.0
    %592 = vmatpush1.xpose.msra.mxu0 0.0
    %593 = vmatprep.subr.mxu0 0.0
    %594 = vmatpush1.xpose.msra.mxu0 0.0
    %595 = vmatprep.subr.mxu0 0.0
    %596 = vmatpush1.xpose.msra.mxu0 0.0
    %597 = vmatprep.subr.mxu0 0.0
    %598 = vmatpush1.xpose.msra.mxu0 0.0
    %599 = vmatprep.subr.mxu0 0.0
    %600 = vmatpush1.xpose.msra.mxu0 0.0
    %601 = vmatprep.subr.mxu0 0.0
    %602 = vmatpush1.xpose.msra.mxu0 0.0
    %603 = vmatprep.subr.mxu0 0.0
    %604 = vmatpush1.xpose.msra.mxu0 0.0
    %605 = vmatprep.subr.mxu0 0.0
    %606 = vmatpush1.xpose.msra.mxu0 0.0
    %607 = vmatprep.subr.mxu0 0.0
    %608 = vmatpush1.xpose.msra.mxu0 0.0
    %609 = vmatprep.subr.mxu0 0.0
    %610 = vmatpush1.xpose.msra.mxu0 0.0
    %611 = vmatprep.subr.mxu0 0.0
    %612 = vmatpush1.xpose.msra.mxu0 0.0
    %613 = vmatprep.subr.mxu0 0.0
    %614 = vmatpush1.xpose.msra.mxu0 0.0
    %615 = vmatprep.subr.mxu0 0.0
    %616 = vmatpush1.xpose.msra.mxu0 0.0
    %617 = vmatprep.subr.mxu0 0.0
    %618 = vmatpush1.xpose.msra.mxu0 0.0
    %619 = vmatprep.subr.mxu0 0.0
    %620 = vmatpush1.xpose.msra.mxu0 0.0
    %621 = vmatprep.subr.mxu0 0.0
    %622 = vmatpush1.xpose.msra.mxu0 0.0
    %623 = vmatprep.subr.mxu0 0.0
    %624 = vmatpush1.xpose.msra.mxu0 0.0
    %625 = vmatprep.subr.mxu0 0.0
    %626 = vmatpush1.xpose.msra.mxu0 0.0
    %627 = vmatprep.subr.mxu0 0.0
    %628 = vmatpush1.xpose.msra.mxu0 0.0
    %629 = vmatprep.subr.mxu0 0.0
    %630 = vmatpush1.xpose.msra.mxu0 0.0
    %631 = vmatprep.subr.mxu0 0.0
    %632 = vmatpush1.xpose.msra.mxu0 0.0
    %633 = vmatprep.subr.mxu0 0.0
    %634 = vmatpush1.xpose.msra.mxu0 0.0
    %635 = vmatprep.mubr.f32.mxu0 0.0
    %636 = vmatmul.mubr.f32.gmra.mrb[0].mxu0 %v563
    %v637 = vpop.f32.mrb[0].mxu0
    %v638 = vadd.f32 0.0, %v637
    %v639 = vpop.f32.mrb[0].mxu0
    %640 = vmatprep.mubr.f32.mxu0 0.0
    %641 = vmatmul.mubr.f32.gmra.mrb[0].mxu0 %v566
    %v642 = vpop.f32.mrb[0].mxu0
    %v643 = vadd.f32 0.0, %v642
    %v644 = vpop.f32.mrb[0].mxu0
    %645 = vmatprep.mubr.f32.mxu0 0.0
    %646 = vmatmul.mubr.f32.gmra.mrb[0].mxu0 %v569
    %v647 = vpop.f32.mrb[0].mxu0
    %v648 = vadd.f32 0.0, %v647
    %v649 = vpop.f32.mrb[0].mxu0
    %650 = vdwg.mxu0
    %v651 = vmul.f32 %v638, 0.17677669
    %v652 = vmul.f32 %v643, 0.17677669
    %v653 = vmul.f32 %v648, 0.17677669
    %v654 = vadd.f32 %v651, %v334
    %v655 = vadd.f32 %v652, %v335
    %v656 = vadd.f32 %v653, %v336
    %v657 = vsel %vm432, %v654, -inf
    %658 = vmax.xlane.f32.xlu0 %v657
    %v659 = vpop.xlane.xlu0 %658
    %v660 = vsel %vm432, %v655, -inf
    %661 = vmax.xlane.f32.xlu0 %v660
    %v662 = vpop.xlane.xlu0 %661
    %v663 = vsel %vm439, %v656, -inf
    %664 = vmax.xlane.f32.xlu0 %v663
    %v665 = vpop.xlane.xlu0 %664
    %v666 = vsub.f32 %v654, %v659
    %v667 = vsub.f32 %v655, %v662
    %v668 = vsub.f32 %v656, %v665
    %v669 = vmul.f32 %v666, 1.442695
    %v670 = vpow.pop %v669
    %v671 = vmul.f32 %v667, 1.442695
    %v672 = vpow.pop %v671
    %v673 = vmul.f32 %v668, 1.442695
    %v674 = vpow.pop %v673
    %v675 = vsel %vm432, %v670, 0.0
    %676 = vadd.xlane.f32.xlu0 %v675
    %v677 = vpop.xlane.xlu0 %676
    %v678 = vsel %vm432, %v672, 0.0
    %679 = vadd.xlane.f32.xlu0 %v678
    %v680 = vpop.xlane.xlu0 %679
    %v681 = vsel %vm439, %v674, 0.0
    %682 = vadd.xlane.f32.xlu0 %v681
    %v683 = vpop.xlane.xlu0 %682
    %v684 = vrcp.pop %v677
    %v685 = vrcp.pop %v680
    %v686 = vrcp.pop %v683
    %v687 = vmul.f32 %v670, %v684
    %v688 = vmul.f32 %v672, %v685
    %v689 = vmul.f32 %v674, %v686
    %v691 = vsel %vm432, %v687, 0
    %v694 = vsel %vm432, %v688, 0
    %v697 = vsel %vm432, %v689, 0
    %v699 = vsel %vm476, %v561, 0
    %701 = vmatprep.subr.mxu0 0.0
    %702 = vmatpush1.msra.mxu0 %v559
    %703 = vmatprep.subr.mxu0 0.0
    %704 = vmatpush1.msra.mxu0 %v560
    %705 = vmatprep.subr.mxu0 0.0
    %706 = vmatpush1.msra.mxu0 %v699
    %707 = vmatprep.subr.mxu0 0.0
    %708 = vmatpush1.msra.mxu0 0.0
    %709 = vmatprep.subr.mxu0 0.0
    %710 = vmatpush1.msra.mxu0 0.0
    %711 = vmatprep.subr.mxu0 0.0
    %712 = vmatpush1.msra.mxu0 0.0
    %713 = vmatprep.subr.mxu0 0.0
    %714 = vmatpush1.msra.mxu0 0.0
    %715 = vmatprep.subr.mxu0 0.0
    %716 = vmatpush1.msra.mxu0 0.0
    %717 = vmatprep.subr.mxu0 0.0
    %718 = vmatpush1.msra.mxu0 0.0
    %719 = vmatprep.subr.mxu0 0.0
    %720 = vmatpush1.msra.mxu0 0.0
    %721 = vmatprep.subr.mxu0 0.0
    %722 = vmatpush1.msra.mxu0 0.0
    %723 = vmatprep.subr.mxu0 0.0
    %724 = vmatpush1.msra.mxu0 0.0
    %725 = vmatprep.subr.mxu0 0.0
    %726 = vmatpush1.msra.mxu0 0.0
    %727 = vmatprep.subr.mxu0 0.0
    %728 = vmatpush1.msra.mxu0 0.0
    %729 = vmatprep.subr.mxu0 0.0
    %730 = vmatpush1.msra.mxu0 0.0
    %731 = vmatprep.subr.mxu0 0.0
    %732 = vmatpush1.msra.mxu0 0.0
    %733 = vmatprep.subr.mxu0 0.0
    %734 = vmatpush1.msra.mxu0 0.0
    %735 = vmatprep.subr.mxu0 0.0
    %736 = vmatpush1.msra.mxu0 0.0
    %737 = vmatprep.subr.mxu0 0.0
    %738 = vmatpush1.msra.mxu0 0.0
    %739 = vmatprep.subr.mxu0 0.0
    %740 = vmatpush1.msra.mxu0 0.0
    %741 = vmatprep.subr.mxu0 0.0
    %742 = vmatpush1.msra.mxu0 0.0
    %743 = vmatprep.subr.mxu0 0.0
    %744 = vmatpush1.msra.mxu0 0.0
    %745 = vmatprep.subr.mxu0 0.0
    %746 = vmatpush1.msra.mxu0 0.0
    %747 = vmatprep.subr.mxu0 0.0
    %748 = vmatpush1.msra.mxu0 0.0
    %749 = vmatprep.subr.mxu0 0.0
    %750 = vmatpush1.msra.mxu0 0.0
    %751 = vmatprep.subr.mxu0 0.0
    %752 = vmatpush1.msra.mxu0 0.0
    %753 = vmatprep.subr.mxu0 0.0
    %754 = vmatpush1.msra.mxu0 0.0
    %755 = vmatprep.subr.mxu0 0.0
    %756 = vmatpush1.msra.mxu0 0.0
    %757 = vmatprep.subr.mxu0 0.0
    %758 = vmatpush1.msra.mxu0 0.0
    %759 = vmatprep.subr.mxu0 0.0
    %760 = vmatpush1.msra.mxu0 0.0
    %761 = vmatprep.subr.mxu0 0.0
    %762 = vmatpush1.msra.mxu0 0.0
    %763 = vmatprep.subr.mxu0 0.0
    %764 = vmatpush1.msra.mxu0 0.0
    %765 = vmatprep.mubr.f32.mxu0 0.0
    %766 = vmatmul.mubr.f32.gmra.mrb[0].mxu0 %v691
    %v767 = vpop.f32.mrb[0].mxu0
    %v768 = vadd.f32 0.0, %v767
    %v769 = vpop.f32.mrb[0].mxu0
    %770 = vmatprep.mubr.f32.mxu0 0.0
    %771 = vmatmul.mubr.f32.gmra.mrb[0].mxu0 %v694
    %v772 = vpop.f32.mrb[0].mxu0
    %v773 = vadd.f32 0.0, %v772
    %v774 = vpop.f32.mrb[0].mxu0
    %775 = vmatprep.mubr.f32.mxu0 0.0
    %776 = vmatmul.mubr.f32.gmra.mrb[0].mxu0 %v697
    %v777 = vpop.f32.mrb[0].mxu0
    %v778 = vadd.f32 0.0, %v777
    %v779 = vpop.f32.mrb[0].mxu0
    %780 = vdwg.mxu0
    %v781 = vsel %vm124, 0.0, %v768
    %v782 = vsel %vm124, 0.0, %v773
    %v783 = vsel %vm124, 0.0, %v778
    %v784 = vmul.f32 %v781, %v781
    %v785 = vmul.f32 %v782, %v782
    %v786 = vmul.f32 %v783, %v783
    %v787 = vsel %vm131, %v784, 0.0
    %788 = vadd.xlane.f32.xlu0 %v787
    %v789 = vpop.xlane.xlu0 %788
    %v790 = vsel %vm131, %v785, 0.0
    %791 = vadd.xlane.f32.xlu0 %v790
    %v792 = vpop.xlane.xlu0 %791
    %v793 = vsel %vm138, %v786, 0.0
    %794 = vadd.xlane.f32.xlu0 %v793
    %v795 = vpop.xlane.xlu0 %794
    %v796 = vrsqrt.pop %v789
    %v797 = vmul.f32 %v789, %v796
    %vm798 = vcmp.eq.f32.partialorder %v789, inf
    %v799 = vsel %vm798, %v789, %v797
    %vm800 = vcmp.eq.f32.partialorder %v789, 0.0
    %v801 = vand.u32 %v789, 2147483648
    %v802 = vsel %vm800, %v801, %v799
    %v803 = vrsqrt.pop %v792
    %v804 = vmul.f32 %v792, %v803
    %vm805 = vcmp.eq.f32.partialorder %v792, inf
    %v806 = vsel %vm805, %v792, %v804
    %vm807 = vcmp.eq.f32.partialorder %v792, 0.0
    %v808 = vand.u32 %v792, 2147483648
    %v809 = vsel %vm807, %v808, %v806
    %v810 = vrsqrt.pop %v795
    %v811 = vmul.f32 %v795, %v810
    %vm812 = vcmp.eq.f32.partialorder %v795, inf
    %v813 = vsel %vm812, %v795, %v811
    %vm814 = vcmp.eq.f32.partialorder %v795, 0.0
    %v815 = vand.u32 %v795, 2147483648
    %v816 = vsel %vm814, %v815, %v813
    %v817 = vmax.f32 %v802, 1e-15
    %v818 = vmax.f32 %v809, 1e-15
    %v819 = vmax.f32 %v816, 1e-15
    %v820 = vrcp.pop %v817
    %v821 = vmul.f32 1.0, %v820
    %v822 = vrcp.pop %v818
    %v823 = vmul.f32 1.0, %v822
    %v824 = vrcp.pop %v819
    %v825 = vmul.f32 1.0, %v824
    %v826 = vmul.f32 %v817, 1.442695
    %v827 = vpow.pop %v826
    %v828 = vmul.f32 %v818, 1.442695
    %v829 = vpow.pop %v828
    %v830 = vmul.f32 %v819, 1.442695
    %v831 = vpow.pop %v830
    %v832 = vsub.f32 0.0, %v817
    %v833 = vsub.f32 0.0, %v818
    %v834 = vsub.f32 0.0, %v819
    %v835 = vmul.f32 %v832, 1.442695
    %v836 = vpow.pop %v835
    %v837 = vmul.f32 %v833, 1.442695
    %v838 = vpow.pop %v837
    %v839 = vmul.f32 %v834, 1.442695
    %v840 = vpow.pop %v839
    %v841 = vsub.f32 %v827, %v836
    %v842 = vsub.f32 %v829, %v838
    %v843 = vsub.f32 %v831, %v840
    %v844 = vmul.f32 %v841, 0.5
    %v845 = vmul.f32 %v842, 0.5
    %v846 = vmul.f32 %v843, 0.5
    %v847 = vmul.f32 %v844, %v821
    %v848 = vmul.f32 %v845, %v823
    %v849 = vmul.f32 %v846, %v825
    %v850 = vmul.f32 %v847, %v781
    %v851 = vmul.f32 %v848, %v782
    %v852 = vmul.f32 %v849, %v783
    %v853 = vsel %vm124, 0.0, %v850
    %v854 = vsel %vm124, 0.0, %v851
    %v855 = vsel %vm124, 0.0, %v852
    %v856 = vmul.f32 %v853, %v853
    %v857 = vmul.f32 %v854, %v854
    %v858 = vmul.f32 %v855, %v855
    %v859 = vsel %vm131, %v856, 0.0
    %860 = vadd.xlane.f32.xlu0 %v859
    %v861 = vpop.xlane.xlu0 %860
    %v862 = vsel %vm131, %v857, 0.0
    %863 = vadd.xlane.f32.xlu0 %v862
    %v864 = vpop.xlane.xlu0 %863
    %v865 = vsel %vm138, %v858, 0.0
    %866 = vadd.xlane.f32.xlu0 %v865
    %v867 = vpop.xlane.xlu0 %866
    %v868 = vadd.f32 %v861, 1.0
    %v869 = vadd.f32 %v864, 1.0
    %v870 = vadd.f32 %v867, 1.0
    %v871 = vmax.f32 %v868, 0.004
    %v872 = vmax.f32 %v869, 0.004
    %v873 = vmax.f32 %v870, 0.004
    %v874 = vrsqrt.pop %v871
    %v875 = vmul.f32 %v871, %v874
    %vm876 = vcmp.eq.f32.partialorder %v871, inf
    %v877 = vsel %vm876, %v871, %v875
    %vm878 = vcmp.eq.f32.partialorder %v871, 0.0
    %v879 = vand.u32 %v871, 2147483648
    %v880 = vsel %vm878, %v879, %v877
    %v881 = vrsqrt.pop %v872
    %v882 = vmul.f32 %v872, %v881
    %vm883 = vcmp.eq.f32.partialorder %v872, inf
    %v884 = vsel %vm883, %v872, %v882
    %vm885 = vcmp.eq.f32.partialorder %v872, 0.0
    %v886 = vand.u32 %v872, 2147483648
    %v887 = vsel %vm885, %v886, %v884
    %v888 = vrsqrt.pop %v873
    %v889 = vmul.f32 %v873, %v888
    %vm890 = vcmp.eq.f32.partialorder %v873, inf
    %v891 = vsel %vm890, %v873, %v889
    %vm892 = vcmp.eq.f32.partialorder %v873, 0.0
    %v893 = vand.u32 %v873, 2147483648
    %v894 = vsel %vm892, %v893, %v891
    %v895 = vsel %vm124, %v880, %v850
    %v896 = vsel %vm124, %v887, %v851
    %v897 = vsel %vm124, %v894, %v852
    %v898 = vld [vmem:[%s1 + $0xf8] sm:$0xf]
    %v900 = vsel %vm432, %v898, 0
    %v903 = vsel %vm476, %v897, 0
    %905 = vmatprep.subr.mxu0 0.0
    %906 = vmatpush1.msra.mxu0 %v895
    %907 = vmatprep.subr.mxu0 0.0
    %908 = vmatpush1.msra.mxu0 %v896
    %909 = vmatprep.subr.mxu0 0.0
    %910 = vmatpush1.msra.mxu0 %v903
    %911 = vmatprep.subr.mxu0 0.0
    %912 = vmatpush1.msra.mxu0 0.0
    %913 = vmatprep.subr.mxu0 0.0
    %914 = vmatpush1.msra.mxu0 0.0
    %915 = vmatprep.subr.mxu0 0.0
    %916 = vmatpush1.msra.mxu0 0.0
    %917 = vmatprep.subr.mxu0 0.0
    %918 = vmatpush1.msra.mxu0 0.0
    %919 = vmatprep.subr.mxu0 0.0
    %920 = vmatpush1.msra.mxu0 0.0
    %921 = vmatprep.subr.mxu0 0.0
    %922 = vmatpush1.msra.mxu0 0.0
    %923 = vmatprep.subr.mxu0 0.0
    %924 = vmatpush1.msra.mxu0 0.0
    %925 = vmatprep.subr.mxu0 0.0
    %926 = vmatpush1.msra.mxu0 0.0
    %927 = vmatprep.subr.mxu0 0.0
    %928 = vmatpush1.msra.mxu0 0.0
    %929 = vmatprep.subr.mxu0 0.0
    %930 = vmatpush1.msra.mxu0 0.0
    %931 = vmatprep.subr.mxu0 0.0
    %932 = vmatpush1.msra.mxu0 0.0
    %933 = vmatprep.subr.mxu0 0.0
    %934 = vmatpush1.msra.mxu0 0.0
    %935 = vmatprep.subr.mxu0 0.0
    %936 = vmatpush1.msra.mxu0 0.0
    %937 = vmatprep.subr.mxu0 0.0
    %938 = vmatpush1.msra.mxu0 0.0
    %939 = vmatprep.subr.mxu0 0.0
    %940 = vmatpush1.msra.mxu0 0.0
    %941 = vmatprep.subr.mxu0 0.0
    %942 = vmatpush1.msra.mxu0 0.0
    %943 = vmatprep.subr.mxu0 0.0
    %944 = vmatpush1.msra.mxu0 0.0
    %945 = vmatprep.subr.mxu0 0.0
    %946 = vmatpush1.msra.mxu0 0.0
    %947 = vmatprep.subr.mxu0 0.0
    %948 = vmatpush1.msra.mxu0 0.0
    %949 = vmatprep.subr.mxu0 0.0
    %950 = vmatpush1.msra.mxu0 0.0
    %951 = vmatprep.subr.mxu0 0.0
    %952 = vmatpush1.msra.mxu0 0.0
    %953 = vmatprep.subr.mxu0 0.0
    %954 = vmatpush1.msra.mxu0 0.0
    %955 = vmatprep.subr.mxu0 0.0
    %956 = vmatpush1.msra.mxu0 0.0
    %957 = vmatprep.subr.mxu0 0.0
    %958 = vmatpush1.msra.mxu0 0.0
    %959 = vmatprep.subr.mxu0 0.0
    %960 = vmatpush1.msra.mxu0 0.0
    %961 = vmatprep.subr.mxu0 0.0
    %962 = vmatpush1.msra.mxu0 0.0
    %963 = vmatprep.subr.mxu0 0.0
    %964 = vmatpush1.msra.mxu0 0.0
    %965 = vmatprep.subr.mxu0 0.0
    %966 = vmatpush1.msra.mxu0 0.0
    %967 = vmatprep.subr.mxu0 0.0
    %968 = vmatpush1.msra.mxu0 0.0
    %969 = vmatprep.mubr.f32.mxu0 0.0
    %970 = vmatmul.mubr.f32.gmra.mrb[0].mxu0 %v900
    %v971 = vpop.f32.mrb[0].mxu0
    %v972 = vadd.f32 0.0, %v971
    %v973 = vpop.f32.mrb[0].mxu0
    %974 = vdwg.mxu0
    %v976 = vrot.slane %v972, 2
    %977 = vrot.lane.b32.xlu0 %v976, 32
    %v978 = vpop.permute.xlu0 %977
    %v980 = vsel %vm131, %v972, %v978
    %v981 = vsel %vm124, 0.0, %v980
    %v982 = vmul.f32 %v981, %v981
    %vm983 = vcmask 517120
    %v984 = vsel %vm983, %v982, 0.0
    %985 = vadd.xlane.f32.xlu0 %v984
    %v986 = vpop.xlane.xlu0 %985
    %v987 = vrsqrt.pop %v986
    %v988 = vmul.f32 %v986, %v987
    %vm989 = vcmp.eq.f32.partialorder %v986, inf
    %v990 = vsel %vm989, %v986, %v988
    %vm991 = vcmp.eq.f32.partialorder %v986, 0.0
    %v992 = vand.u32 %v986, 2147483648
    %v993 = vsel %vm991, %v992, %v990
    %v994 = vmax.f32 %v993, 1e-15
    %v995 = vmax.f32 %v980, 1.004
    %v996 = vmul.f32 %v995, %v995
    %v997 = vsub.f32 %v996, 1.0
    %v998 = vrsqrt.pop %v997
    %v999 = vmul.f32 %v997, %v998
    %vm1000 = vcmp.eq.f32.partialorder %v997, inf
    %v1001 = vsel %vm1000, %v997, %v999
    %vm1002 = vcmp.eq.f32.partialorder %v997, 0.0
    %v1003 = vand.u32 %v997, 2147483648
    %v1004 = vsel %vm1002, %v1003, %v1001
    %v1005 = vadd.f32 %v995, %v1004
    %v1006 = vlog2.pop %v1005
    %v1007 = vmul.f32 %v1006, 0.6931472
    %v1008 = vrcp.pop %v994
    %v1009 = vmul.f32 %v1007, %v1008
    %1011 = vset.pattern.permute.xlu0 0
    %1012 = vperm.xlu0 %1011, %v1009
    %v1013 = vpop.permute.xlu0 %1012
    %v1015 = vmul.f32 %v1013, %v981
    %v1016 = vsel %vm124, 0.0, %v1015
    %v1017 = vld [vmem:[%s1 + $0x88] sm:$0xff]
    %v1018 = vld [vmem:[%s1 + $0x90] sm:$0xff]
    %v1019 = vld [vmem:[%s1 + $0x98] sm:$0xff]
    %v1020 = vld [vmem:[%s1 + $0xa0] sm:$0xff]
    %v1021 = vld [vmem:[%s1 + $0xa8] sm:$0xff]
    %v1022 = vld [vmem:[%s1 + $0xb0] sm:$0xff]
    %v1023 = vld [vmem:[%s1 + $0xb8] sm:$0xff]
    %v1024 = vld [vmem:[%s1 + $0xc0] sm:$0xff]
    %v1025 = vld [vmem:[%s1 + $0xc8] sm:$0x1]
    %v1026 = vlaneseq
    %v1027 = vshrl.u32 %v1026, 7
    %v1028 = vsub.s32 0, %v1027
    %v1029 = vrot.slane %v1025, %v1028
    %vm1030 = vcmask 523264
    %v1032 = vsel %vm1030, %v1016, 0
    %1034 = vmatprep.subr.mxu0 0.0
    %1035 = vmatpush1.msra.mxu0 %v1017
    %1036 = vmatprep.subr.mxu0 0.0
    %1037 = vmatpush1.msra.mxu0 %v1018
    %1038 = vmatprep.subr.mxu0 0.0
    %1039 = vmatpush1.msra.mxu0 %v1019
    %1040 = vmatprep.subr.mxu0 0.0
    %1041 = vmatpush1.msra.mxu0 %v1020
    %1042 = vmatprep.subr.mxu0 0.0
    %1043 = vmatpush1.msra.mxu0 %v1021
    %1044 = vmatprep.subr.mxu0 0.0
    %1045 = vmatpush1.msra.mxu0 %v1022
    %1046 = vmatprep.subr.mxu0 0.0
    %1047 = vmatpush1.msra.mxu0 %v1023
    %1048 = vmatprep.subr.mxu0 0.0
    %1049 = vmatpush1.msra.mxu0 %v1024
    %1050 = vmatprep.subr.mxu0 0.0
    %1051 = vmatpush1.msra.mxu0 0.0
    %1052 = vmatprep.subr.mxu0 0.0
    %1053 = vmatpush1.msra.mxu0 0.0
    %1054 = vmatprep.subr.mxu0 0.0
    %1055 = vmatpush1.msra.mxu0 0.0
    %1056 = vmatprep.subr.mxu0 0.0
    %1057 = vmatpush1.msra.mxu0 0.0
    %1058 = vmatprep.subr.mxu0 0.0
    %1059 = vmatpush1.msra.mxu0 0.0
    %1060 = vmatprep.subr.mxu0 0.0
    %1061 = vmatpush1.msra.mxu0 0.0
    %1062 = vmatprep.subr.mxu0 0.0
    %1063 = vmatpush1.msra.mxu0 0.0
    %1064 = vmatprep.subr.mxu0 0.0
    %1065 = vmatpush1.msra.mxu0 0.0
    %1066 = vmatprep.subr.mxu0 0.0
    %1067 = vmatpush1.msra.mxu0 0.0
    %1068 = vmatprep.subr.mxu0 0.0
    %1069 = vmatpush1.msra.mxu0 0.0
    %1070 = vmatprep.subr.mxu0 0.0
    %1071 = vmatpush1.msra.mxu0 0.0
    %1072 = vmatprep.subr.mxu0 0.0
    %1073 = vmatpush1.msra.mxu0 0.0
    %1074 = vmatprep.subr.mxu0 0.0
    %1075 = vmatpush1.msra.mxu0 0.0
    %1076 = vmatprep.subr.mxu0 0.0
    %1077 = vmatpush1.msra.mxu0 0.0
    %1078 = vmatprep.subr.mxu0 0.0
    %1079 = vmatpush1.msra.mxu0 0.0
    %1080 = vmatprep.subr.mxu0 0.0
    %1081 = vmatpush1.msra.mxu0 0.0
    %1082 = vmatprep.subr.mxu0 0.0
    %1083 = vmatpush1.msra.mxu0 0.0
    %1084 = vmatprep.subr.mxu0 0.0
    %1085 = vmatpush1.msra.mxu0 0.0
    %1086 = vmatprep.subr.mxu0 0.0
    %1087 = vmatpush1.msra.mxu0 0.0
    %1088 = vmatprep.subr.mxu0 0.0
    %1089 = vmatpush1.msra.mxu0 0.0
    %1090 = vmatprep.subr.mxu0 0.0
    %1091 = vmatpush1.msra.mxu0 0.0
    %1092 = vmatprep.subr.mxu0 0.0
    %1093 = vmatpush1.msra.mxu0 0.0
    %1094 = vmatprep.subr.mxu0 0.0
    %1095 = vmatpush1.msra.mxu0 0.0
    %1096 = vmatprep.subr.mxu0 0.0
    %1097 = vmatpush1.msra.mxu0 0.0
    %1098 = vmatprep.mubr.f32.mxu0 0.0
    %1099 = vmatmul.mubr.f32.gmra.mrb[0].mxu0 %v1032
    %v1100 = vpop.f32.mrb[0].mxu0
    %v1101 = vadd.f32 %v1029, %v1100
    %v1102 = vpop.f32.mrb[0].mxu0
    %1103 = vdwg.mxu0
    %v1104 = vmax.f32 %v1101, 0.0
    %v1105 = vld [vmem:[%s1 + $0xd0] sm:$0xff]
    %v1106 = vld [vmem:[%s1 + $0xd8] sm:$0xff]
    %v1107 = vld [vmem:[%s1 + $0xe0] sm:$0xff]
    %v1108 = vld [vmem:[%s1 + $0xe8] sm:$0xff]
    %v1109 = vld [vmem:[%s1 + $0xf0] sm:$0x1]
    %v1110 = vlaneseq
    %v1111 = vshrl.u32 %v1110, 7
    %v1112 = vsub.s32 0, %v1111
    %v1113 = vrot.slane %v1109, %v1112
    %v1115 = vsel %vm131, %v1104, 0
    %1117 = vmatprep.subr.mxu0 0.0
    %1118 = vmatpush1.msra.mxu0 %v1105
    %1119 = vmatprep.subr.mxu0 0.0
    %1120 = vmatpush1.msra.mxu0 %v1106
    %1121 = vmatprep.subr.mxu0 0.0
    %1122 = vmatpush1.msra.mxu0 %v1107
    %1123 = vmatprep.subr.mxu0 0.0
    %1124 = vmatpush1.msra.mxu0 %v1108
    %1125 = vmatprep.subr.mxu0 0.0
    %1126 = vmatpush1.msra.mxu0 0.0
    %1127 = vmatprep.subr.mxu0 0.0
    %1128 = vmatpush1.msra.mxu0 0.0
    %1129 = vmatprep.subr.mxu0 0.0
    %1130 = vmatpush1.msra.mxu0 0.0
    %1131 = vmatprep.subr.mxu0 0.0
    %1132 = vmatpush1.msra.mxu0 0.0
    %1133 = vmatprep.subr.mxu0 0.0
    %1134 = vmatpush1.msra.mxu0 0.0
    %1135 = vmatprep.subr.mxu0 0.0
    %1136 = vmatpush1.msra.mxu0 0.0
    %1137 = vmatprep.subr.mxu0 0.0
    %1138 = vmatpush1.msra.mxu0 0.0
    %1139 = vmatprep.subr.mxu0 0.0
    %1140 = vmatpush1.msra.mxu0 0.0
    %1141 = vmatprep.subr.mxu0 0.0
    %1142 = vmatpush1.msra.mxu0 0.0
    %1143 = vmatprep.subr.mxu0 0.0
    %1144 = vmatpush1.msra.mxu0 0.0
    %1145 = vmatprep.subr.mxu0 0.0
    %1146 = vmatpush1.msra.mxu0 0.0
    %1147 = vmatprep.subr.mxu0 0.0
    %1148 = vmatpush1.msra.mxu0 0.0
    %1149 = vmatprep.subr.mxu0 0.0
    %1150 = vmatpush1.msra.mxu0 0.0
    %1151 = vmatprep.subr.mxu0 0.0
    %1152 = vmatpush1.msra.mxu0 0.0
    %1153 = vmatprep.subr.mxu0 0.0
    %1154 = vmatpush1.msra.mxu0 0.0
    %1155 = vmatprep.subr.mxu0 0.0
    %1156 = vmatpush1.msra.mxu0 0.0
    %1157 = vmatprep.subr.mxu0 0.0
    %1158 = vmatpush1.msra.mxu0 0.0
    %1159 = vmatprep.subr.mxu0 0.0
    %1160 = vmatpush1.msra.mxu0 0.0
    %1161 = vmatprep.subr.mxu0 0.0
    %1162 = vmatpush1.msra.mxu0 0.0
    %1163 = vmatprep.subr.mxu0 0.0
    %1164 = vmatpush1.msra.mxu0 0.0
    %1165 = vmatprep.subr.mxu0 0.0
    %1166 = vmatpush1.msra.mxu0 0.0
    %1167 = vmatprep.subr.mxu0 0.0
    %1168 = vmatpush1.msra.mxu0 0.0
    %1169 = vmatprep.subr.mxu0 0.0
    %1170 = vmatpush1.msra.mxu0 0.0
    %1171 = vmatprep.subr.mxu0 0.0
    %1172 = vmatpush1.msra.mxu0 0.0
    %1173 = vmatprep.subr.mxu0 0.0
    %1174 = vmatpush1.msra.mxu0 0.0
    %1175 = vmatprep.subr.mxu0 0.0
    %1176 = vmatpush1.msra.mxu0 0.0
    %1177 = vmatprep.subr.mxu0 0.0
    %1178 = vmatpush1.msra.mxu0 0.0
    %1179 = vmatprep.subr.mxu0 0.0
    %1180 = vmatpush1.msra.mxu0 0.0
    %1181 = vmatprep.mubr.f32.mxu0 0.0
    %1182 = vmatmul.mubr.f32.gmra.mrb[0].mxu0 %v1115
    %v1183 = vpop.f32.mrb[0].mxu0
    %v1184 = vadd.f32 %v1113, %v1183
    %v1185 = vpop.f32.mrb[0].mxu0
    %1186 = vdwg.mxu0
    %vm1187 = vcmask 74752
    %v1188 = vsel %vm1187, %v1184, -inf
    %1189 = vmax.xlane.f32.xlu0 %v1188
    %v1190 = vpop.xlane.xlu0 %1189
    %v1191 = vsub.f32 %v1184, %v1190
    %v1192 = vmul.f32 %v1191, 1.442695
    %v1193 = vpow.pop %v1192
    %v1194 = vsel %vm1187, %v1193, 0.0
    %1195 = vadd.xlane.f32.xlu0 %v1194
    %v1196 = vpop.xlane.xlu0 %1195
    %v1197 = vlog2.pop %v1196
    %v1198 = vmul.f32 %v1197, 0.6931472
    %v1199 = vsub.f32 %v1191, %v1198
    %1200 = vst.msk [vmem:[#allocation2] sm:$0x3] %vm1187, %v1199
    // Predicated region
    $region10: #{hypergraph_transformer_forward.1} parent=1 // pred_check
      _
    $region11: #{hypergraph_transformer_forward.1} parent=1 // pred_check_branch
      %1202 = sbr.rel (0) target = $region13
    $region12: #{hypergraph_transformer_forward.1} parent=1 // pred_region
      %s1204 = ssub.s32 32, 32
      %1205 = vsyncadd [#allocation3], %s1204
      %s1207 = sshll.u32 [#allocation2], 4
      %s1208 = int_to_ptr.vmem [resolvable:$true] %s1207
      %1210 = dma.vmem_to_hbm [thread:$0]  %s1208, 32, %s2, [#allocation3]
    $region13: #{hypergraph_transformer_forward.1} parent=1 // pred_fallthru
      _
    // Predicated region
    $region14: #{hypergraph_transformer_forward.1} parent=1 // pred_check
      _
    $region15: #{hypergraph_transformer_forward.1} parent=1 // pred_check_branch
      %1212 = sbr.rel (0) target = $region17
    $region16: #{hypergraph_transformer_forward.1} parent=1 // pred_region
      %1213 = dma.done [#allocation3], 32
    $region17: #{hypergraph_transformer_forward.1} parent=1 // pred_fallthru
      _
    %1214 = vsyncpa [#allocation3], 1

</llo_original>
